<compile_context>
chip_gen: v5e
topology: v5e:2x2
jax: 0.10.0
libtpu: 0.0.40
codegen_flags: <defaults>
</compile_context>

<pallas_src>
import functools

import jax
import jax.numpy as jnp
from jax.experimental import pallas as pl
from jax.experimental.pallas import tpu as pltpu


def _column_attn_kernel(x_ref, wq_ref, wk_ref, wv_ref, wo_ref, bias_ref,
                        out_ref, attn_ref, *,
                        col_tile, batch, num_rows, num_heads, head_dim):
    """One grid step = one block of TC columns; all heads handled inside."""
    TCb, B, R, H, D = col_tile, batch, num_rows, num_heads, head_dim
    NS = TCb * B                       # (col, batch) samples in this block
    M = NS * R                         # activation rows in this block

    x2d = x_ref[...]                   # (M, E), activation dtype
    cdt = x2d.dtype                    # matmul-operand dtype (bf16 MXU path for bf16 x)

    # Fat, MXU-shaped projections: (M, E) @ (E, E), f32 accumulation.
    # Scaling is pre-folded into W_q by the wrapper.
    q = jnp.dot(x2d, wq_ref[...], preferred_element_type=jnp.float32).astype(cdt)
    k = jnp.dot(x2d, wk_ref[...], preferred_element_type=jnp.float32).astype(cdt)
    v = jnp.dot(x2d, wv_ref[...], preferred_element_type=jnp.float32).astype(cdt)

    bias = bias_ref[...]               # (R, R) additive mask: 0 keep / -10000 masked

    ctx_heads = []
    for h in range(H):                 # static unroll -> static lane slices
        lo = h * D
        qh = q[:, lo:lo + D].reshape(NS, R, D)
        kh = k[:, lo:lo + D].reshape(NS, R, D)
        vh = v[:, lo:lo + D].reshape(NS, R, D)

        # Scores for all NS samples of this head at once (batched MXU matmul).
        s = jnp.einsum('nrd,nsd->nrs', qh, kh,
                       preferred_element_type=jnp.float32)        # (NS, R, R) f32
        s = s + bias[None]

        # Softmax over the last axis, in f32 (exact reciprocal to match reference).
        m = jnp.max(s, axis=-1, keepdims=True)
        e = jnp.exp(s - m)
        denom = jnp.sum(e, axis=-1, keepdims=True)
        p = e * pl.reciprocal(denom, approx=False)

        # Lane-dense probs store: last dim R*R instead of R.
        attn_ref[h] = p.reshape(TCb, B, R * R).astype(attn_ref.dtype)

        ctx_heads.append(
            jnp.einsum('nrs,nsd->nrd', p.astype(cdt), vh,
                       preferred_element_type=jnp.float32).reshape(M, D))

    # One fat out-proj with contraction K = E (no per-head accumulator RMW).
    ctx = jnp.concatenate(ctx_heads, axis=-1).astype(cdt)          # (M, E)
    out_ref[...] = jnp.dot(ctx, wo_ref[...],
                           preferred_element_type=jnp.float32).astype(out_ref.dtype)


def _vmem_capacity_bytes():
    try:
        return int(pltpu.get_tpu_info().vmem_capacity_bytes)
    except Exception:
        return 64 * 1024 * 1024        # conservative (v7x-sized) fallback


def _pick_col_tile(C, B, R, E, H, itemsize, *, target_m, vmem_budget):
    """Pick a column tile TC (divisor of C).

    Largest tile whose estimated working set fits the VMEM budget, preferring
    >= 2 column blocks (so v7x's two TensorCores both get work and the
    pipeline has >= 2 steps), and stopping once M = TC*B*R reaches target_m.
    """
    def est(tc):
        m, ns = tc * B * R, tc * B
        return (2 * m * E * itemsize              # x block (double-buffered)
                + 2 * m * E * itemsize            # out block
                + 2 * H * ns * R * R * itemsize   # attn-probs block
                + 2 * 4 * E * E * itemsize        # q/k/v/o weight slabs
                + 2 * R * R * 4                   # mask bias
                + 3 * m * E * 4                   # q/k/v f32 projections
                + 2 * m * E * 4                   # ctx pieces + out-proj f32
                + 2 * m * E * itemsize            # operand casts
                + 4 * ns * R * R * 4)             # scores / exp / probs temporaries

    divisors = [tc for tc in range(1, C + 1) if C % tc == 0]
    # (8, 128) constraint on the (M, E) activation/output blocks.
    valid = [tc for tc in divisors if (tc * B * R) % 8 == 0 or tc == C] or [C]
    fits = [tc for tc in valid if est(tc) <= vmem_budget] or [valid[0]]
    multi = [tc for tc in fits if C // tc >= 2]
    pool = multi if multi else fits
    best = pool[0]
    for tc in pool:
        best = tc
        if tc * B * R >= target_m:
            break
    return best


def column_self_attention(x, wq, wk, wv, wo, num_heads):
    """x: (R, C, B, E); wq/wk/wv/wo: (E, E) nn.Linear weights (y = x @ W.T).

    Returns (output (R, C, B, E), attn_probs (H, C, B, R, R)).
    """
    R, C, B, E = x.shape
    H = num_heads
    assert R > 1, "num_rows == 1 fast path not implemented"
    assert E % H == 0, "embed_dim must be divisible by num_heads"
    D = E // H
    scaling = float(D) ** -0.5
    dt = x.dtype

    # Weights as x @ W.T slabs, cast to the activation dtype; scaling folded into Wq.
    wq_t = (jnp.transpose(wq) * scaling).astype(dt)   # (E, E)
    wk_t = jnp.transpose(wk).astype(dt)
    wv_t = jnp.transpose(wv).astype(dt)
    wo_t = jnp.transpose(wo).astype(dt)

    # Dense activation slab: (R, C, B, E) -> (C, B, R, E) -> (C*B*R, E).
    x2d = jnp.transpose(x, (1, 2, 0, 3)).reshape(C * B * R, E)

    # Column-causal mask (torch.tril) as a resident additive bias (0 / -10000).
    tril = jnp.tril(jnp.ones((R, R), jnp.float32))
    bias = (tril - 1.0) * 10000.0

    cap = _vmem_capacity_bytes()
    vmem_limit = int(min(cap * 5 // 8, 96 * 1024 * 1024))  # ~40 MiB v7x, ~80 MiB v5e/v6e
    budget = max(16 * 1024 * 1024, vmem_limit - 12 * 1024 * 1024)
    TC = _pick_col_tile(C, B, R, E, H, jnp.dtype(dt).itemsize,
                        target_m=1024, vmem_budget=budget)
    M = TC * B * R

    kernel = functools.partial(_column_attn_kernel, col_tile=TC, batch=B,
                               num_rows=R, num_heads=H, head_dim=D)

    out2d, attn = pl.pallas_call(
        kernel,
        out_shape=(
            jax.ShapeDtypeStruct((C * B * R, E), dt),
            jax.ShapeDtypeStruct((H, C, B, R * R), dt),
        ),
        grid=(C // TC,),
        in_specs=[
            pl.BlockSpec((M, E), lambda c: (c, 0)),          # activations
            pl.BlockSpec((E, E), lambda c: (0, 0)),          # W_q^T (pre-scaled), resident
            pl.BlockSpec((E, E), lambda c: (0, 0)),          # W_k^T
            pl.BlockSpec((E, E), lambda c: (0, 0)),          # W_v^T
            pl.BlockSpec((E, E), lambda c: (0, 0)),          # W_o^T
            pl.BlockSpec((R, R), lambda c: (0, 0)),          # additive mask bias
        ],
        out_specs=[
            pl.BlockSpec((M, E), lambda c: (c, 0)),                    # output slab
            pl.BlockSpec((H, TC, B, R * R), lambda c: (0, c, 0, 0)),   # probs, lane-dense
        ],
        compiler_params=pltpu.CompilerParams(
            dimension_semantics=("parallel",),
            vmem_limit_bytes=vmem_limit,
        ),
    )(x2d, wq_t, wk_t, wv_t, wo_t, bias)

    output = out2d.reshape(C, B, R, E).transpose(2, 0, 1, 3)    # (R, C, B, E)
    attn_probs = attn.reshape(H, C, B, R, R)                    # metadata-only reshape
    return output, attn_probs


def _reference(x, wq, wk, wv, wo, num_heads):
    """Pure-JAX port of compute_attention_update (R > 1, no masks, no rope)."""
    R, C, B, E = x.shape
    H = num_heads
    D = E // H
    q = (x @ wq.T).reshape(R, C, B, H, D) * (D ** -0.5)
    k = (x @ wk.T).reshape(R, C, B, H, D)
    v = (x @ wv.T).reshape(R, C, B, H, D)
    aw = jnp.einsum('icnhd,jcnhd->hcnij', q, k)
    causal = jnp.tril(jnp.ones((R, R), dtype=bool))
    aw = jnp.where(causal[None, None, None], aw, -10000.0)
    ap = jax.nn.softmax(aw, axis=-1)
    ctx = jnp.einsum('hcnij,jcnhd->icnhd', ap, v).reshape(R, C, B, E)
    return ctx @ wo.T, ap


if __name__ == "__main__":
    # Small shapes consistent with the module's forward: (R, C, B, E), H heads.
    R, C, B, E, H = 8, 4, 2, 32, 4

    key = jax.random.PRNGKey(0)
    kx, kq, kk, kv, ko = jax.random.split(key, 5)
    bound = 1.0 / (E ** 0.5)   # nn.Linear default init range
    x = jax.random.normal(kx, (R, C, B, E), dtype=jnp.float32)
    wq = jax.random.uniform(kq, (E, E), jnp.float32, -bound, bound)
    wk = jax.random.uniform(kk, (E, E), jnp.float32, -bound, bound)
    wv = jax.random.uniform(kv, (E, E), jnp.float32, -bound, bound)
    wo = jax.random.uniform(ko, (E, E), jnp.float32, -bound, bound)

    out, attn = column_self_attention(x, wq, wk, wv, wo, num_heads=H)
    out = jax.block_until_ready(out)
    attn = jax.block_until_ready(attn)

    ref_out, ref_attn = _reference(x, wq, wk, wv, wo, num_heads=H)
    assert out.shape == (R, C, B, E)
    assert attn.shape == (H, C, B, R, R)
    assert jnp.allclose(out, ref_out, atol=1e-5, rtol=1e-5)
    assert jnp.allclose(attn, ref_attn, atol=1e-5, rtol=1e-5)

    print("KERNEL_OK")
</pallas_src>

<mosaic_0001>
module attributes {stable_mosaic.version = 11 : i64} {
  func.func @_column_attn_kernel(%arg0: i32, %arg1: memref<32x32xf32, #tpu.memory_space<vmem>>, %arg2: memref<32x32xf32, #tpu.memory_space<vmem>>, %arg3: memref<32x32xf32, #tpu.memory_space<vmem>>, %arg4: memref<32x32xf32, #tpu.memory_space<vmem>>, %arg5: memref<32x32xf32, #tpu.memory_space<vmem>>, %arg6: memref<8x8xf32, #tpu.memory_space<vmem>>, %arg7: memref<32x32xf32, #tpu.memory_space<vmem>>, %arg8: memref<4x2x2x64xf32, #tpu.memory_space<vmem>>) attributes {dimension_semantics = [#tpu.dimension_semantics<parallel>], iteration_bounds = array<i64: 2>, scalar_prefetch = 0 : i64, scratch_operands = 0 : i64, tpu.core_type = #tpu.core_type<tc>, window_params = [{transform_indices = @transform_0, window_bounds = array<i64: 32, 32>}, {pipeline_mode = #tpu.pipeline_mode<synchronous>, transform_indices = @transform_1, window_bounds = array<i64: 32, 32>}, {pipeline_mode = #tpu.pipeline_mode<synchronous>, transform_indices = @transform_2, window_bounds = array<i64: 32, 32>}, {pipeline_mode = #tpu.pipeline_mode<synchronous>, transform_indices = @transform_3, window_bounds = array<i64: 32, 32>}, {pipeline_mode = #tpu.pipeline_mode<synchronous>, transform_indices = @transform_4, window_bounds = array<i64: 32, 32>}, {pipeline_mode = #tpu.pipeline_mode<synchronous>, transform_indices = @transform_5, window_bounds = array<i64: 8, 8>}, {transform_indices = @transform_6, window_bounds = array<i64: 32, 32>}, {transform_indices = @transform_7, window_bounds = array<i64: 4, 2, 2, 64>}]} {
    %c0 = arith.constant 0 : index
    %c0_0 = arith.constant 0 : index
    %0 = vector.load %arg1[%c0, %c0_0] : memref<32x32xf32, #tpu.memory_space<vmem>>, vector<32x32xf32>
    %c0_1 = arith.constant 0 : index
    %c0_2 = arith.constant 0 : index
    %1 = vector.load %arg2[%c0_1, %c0_2] : memref<32x32xf32, #tpu.memory_space<vmem>>, vector<32x32xf32>
    %cst = arith.constant dense<0.000000e+00> : vector<32x32xf32>
    %2 = tpu.matmul %0, %1, %cst {dimension_numbers = #tpu.dot_dimension_numbers<[1], [0], [0], [1], [0, 0, 1, 1], [], []>} : vector<32x32xf32>, vector<32x32xf32>, vector<32x32xf32> -> vector<32x32xf32>
    %c0_3 = arith.constant 0 : index
    %c0_4 = arith.constant 0 : index
    %3 = vector.load %arg3[%c0_3, %c0_4] : memref<32x32xf32, #tpu.memory_space<vmem>>, vector<32x32xf32>
    %cst_5 = arith.constant dense<0.000000e+00> : vector<32x32xf32>
    %4 = tpu.matmul %0, %3, %cst_5 {dimension_numbers = #tpu.dot_dimension_numbers<[1], [0], [0], [1], [0, 0, 1, 1], [], []>} : vector<32x32xf32>, vector<32x32xf32>, vector<32x32xf32> -> vector<32x32xf32>
    %c0_6 = arith.constant 0 : index
    %c0_7 = arith.constant 0 : index
    %5 = vector.load %arg4[%c0_6, %c0_7] : memref<32x32xf32, #tpu.memory_space<vmem>>, vector<32x32xf32>
    %cst_8 = arith.constant dense<0.000000e+00> : vector<32x32xf32>
    %6 = tpu.matmul %0, %5, %cst_8 {dimension_numbers = #tpu.dot_dimension_numbers<[1], [0], [0], [1], [0, 0, 1, 1], [], []>} : vector<32x32xf32>, vector<32x32xf32>, vector<32x32xf32> -> vector<32x32xf32>
    %c0_9 = arith.constant 0 : index
    %c0_10 = arith.constant 0 : index
    %7 = vector.load %arg6[%c0_9, %c0_10] : memref<8x8xf32, #tpu.memory_space<vmem>>, vector<8x8xf32>
    %8 = vector.extract_strided_slice %2 {offsets = [0, 0], sizes = [32, 8], strides = [1, 1]} : vector<32x32xf32> to vector<32x8xf32>
    %9 = vector.shape_cast %8 : vector<32x8xf32> to vector<4x8x8xf32>
    %10 = vector.extract_strided_slice %4 {offsets = [0, 0], sizes = [32, 8], strides = [1, 1]} : vector<32x32xf32> to vector<32x8xf32>
    %11 = vector.shape_cast %10 : vector<32x8xf32> to vector<4x8x8xf32>
    %12 = vector.extract_strided_slice %6 {offsets = [0, 0], sizes = [32, 8], strides = [1, 1]} : vector<32x32xf32> to vector<32x8xf32>
    %13 = vector.shape_cast %12 : vector<32x8xf32> to vector<4x8x8xf32>
    "tpu.trace_start"() <{level = 10 : i32, message = "nrd,nsd->nrs"}> : () -> ()
    %cst_11 = arith.constant dense<0.000000e+00> : vector<4x8x8xf32>
    %14 = tpu.matmul %9, %11, %cst_11 {dimension_numbers = #tpu.dot_dimension_numbers<[2], [2], [1], [1], [0, 0, 0, 1, 1, 1], [0], [0]>} : vector<4x8x8xf32>, vector<4x8x8xf32>, vector<4x8x8xf32> -> vector<4x8x8xf32>
    "tpu.trace_stop"() : () -> ()
    %15 = vector.shape_cast %7 : vector<8x8xf32> to vector<1x8x8xf32>
    %16 = vector.broadcast %15 : vector<1x8x8xf32> to vector<4x8x8xf32>
    %17 = arith.addf %14, %16 : vector<4x8x8xf32>
    %cst_12 = arith.constant dense<0xFF800000> : vector<4x8xf32>
    %18 = vector.multi_reduction <maximumf>, %17, %cst_12 [2] : vector<4x8x8xf32> to vector<4x8xf32>
    %19 = vector.shape_cast %18 : vector<4x8xf32> to vector<4x8x1xf32>
    %20 = vector.broadcast %19 : vector<4x8x1xf32> to vector<4x8x8xf32>
    %21 = arith.subf %17, %20 : vector<4x8x8xf32>
    %22 = math.exp %21 : vector<4x8x8xf32>
    %cst_13 = arith.constant dense<0.000000e+00> : vector<4x8xf32>
    %23 = vector.multi_reduction <add>, %22, %cst_13 [2] : vector<4x8x8xf32> to vector<4x8xf32>
    %24 = vector.shape_cast %23 : vector<4x8xf32> to vector<4x8x1xf32>
    %25 = tpu.reciprocal %24 : vector<4x8x1xf32> -> vector<4x8x1xf32>
    %26 = vector.broadcast %25 : vector<4x8x1xf32> to vector<4x8x8xf32>
    %27 = arith.mulf %22, %26 : vector<4x8x8xf32>
    %28 = vector.shape_cast %27 : vector<4x8x8xf32> to vector<2x2x64xf32>
    %c0_14 = arith.constant 0 : index
    %c0_15 = arith.constant 0 : index
    %c0_16 = arith.constant 0 : index
    %c0_17 = arith.constant 0 : index
    %29 = vector.load %arg8[%c0_14, %c0_15, %c0_16, %c0_17] : memref<4x2x2x64xf32, #tpu.memory_space<vmem>>, vector<1x2x2x64xf32>
    %30 = vector.shape_cast %29 : vector<1x2x2x64xf32> to vector<2x2x64xf32>
    %31 = vector.shape_cast %28 : vector<2x2x64xf32> to vector<1x2x2x64xf32>
    tpu.vector_store %arg8[%c0_14, %c0_15, %c0_16, %c0_17], %31 {strides = array<i32>} : memref<4x2x2x64xf32, #tpu.memory_space<vmem>>, vector<1x2x2x64xf32>,
    "tpu.trace_start"() <{level = 10 : i32, message = "nrs,nsd->nrd"}> : () -> ()
    %cst_18 = arith.constant dense<0.000000e+00> : vector<4x8x8xf32>
    %32 = tpu.matmul %27, %13, %cst_18 {dimension_numbers = #tpu.dot_dimension_numbers<[2], [1], [1], [2], [0, 0, 0, 1, 1, 2], [0], [0]>} : vector<4x8x8xf32>, vector<4x8x8xf32>, vector<4x8x8xf32> -> vector<4x8x8xf32>
    "tpu.trace_stop"() : () -> ()
    %33 = vector.shape_cast %32 : vector<4x8x8xf32> to vector<32x8xf32>
    %34 = vector.extract_strided_slice %2 {offsets = [0, 8], sizes = [32, 8], strides = [1, 1]} : vector<32x32xf32> to vector<32x8xf32>
    %35 = vector.shape_cast %34 : vector<32x8xf32> to vector<4x8x8xf32>
    %36 = vector.extract_strided_slice %4 {offsets = [0, 8], sizes = [32, 8], strides = [1, 1]} : vector<32x32xf32> to vector<32x8xf32>
    %37 = vector.shape_cast %36 : vector<32x8xf32> to vector<4x8x8xf32>
    %38 = vector.extract_strided_slice %6 {offsets = [0, 8], sizes = [32, 8], strides = [1, 1]} : vector<32x32xf32> to vector<32x8xf32>
    %39 = vector.shape_cast %38 : vector<32x8xf32> to vector<4x8x8xf32>
    "tpu.trace_start"() <{level = 10 : i32, message = "nrd,nsd->nrs"}> : () -> ()
    %cst_19 = arith.constant dense<0.000000e+00> : vector<4x8x8xf32>
    %40 = tpu.matmul %35, %37, %cst_19 {dimension_numbers = #tpu.dot_dimension_numbers<[2], [2], [1], [1], [0, 0, 0, 1, 1, 1], [0], [0]>} : vector<4x8x8xf32>, vector<4x8x8xf32>, vector<4x8x8xf32> -> vector<4x8x8xf32>
    "tpu.trace_stop"() : () -> ()
    %41 = vector.shape_cast %7 : vector<8x8xf32> to vector<1x8x8xf32>
    %42 = vector.broadcast %41 : vector<1x8x8xf32> to vector<4x8x8xf32>
    %43 = arith.addf %40, %42 : vector<4x8x8xf32>
    %cst_20 = arith.constant dense<0xFF800000> : vector<4x8xf32>
    %44 = vector.multi_reduction <maximumf>, %43, %cst_20 [2] : vector<4x8x8xf32> to vector<4x8xf32>
    %45 = vector.shape_cast %44 : vector<4x8xf32> to vector<4x8x1xf32>
    %46 = vector.broadcast %45 : vector<4x8x1xf32> to vector<4x8x8xf32>
    %47 = arith.subf %43, %46 : vector<4x8x8xf32>
    %48 = math.exp %47 : vector<4x8x8xf32>
    %cst_21 = arith.constant dense<0.000000e+00> : vector<4x8xf32>
    %49 = vector.multi_reduction <add>, %48, %cst_21 [2] : vector<4x8x8xf32> to vector<4x8xf32>
    %50 = vector.shape_cast %49 : vector<4x8xf32> to vector<4x8x1xf32>
    %51 = tpu.reciprocal %50 : vector<4x8x1xf32> -> vector<4x8x1xf32>
    %52 = vector.broadcast %51 : vector<4x8x1xf32> to vector<4x8x8xf32>
    %53 = arith.mulf %48, %52 : vector<4x8x8xf32>
    %54 = vector.shape_cast %53 : vector<4x8x8xf32> to vector<2x2x64xf32>
    %c1 = arith.constant 1 : index
    %c0_22 = arith.constant 0 : index
    %c0_23 = arith.constant 0 : index
    %c0_24 = arith.constant 0 : index
    %55 = vector.load %arg8[%c1, %c0_22, %c0_23, %c0_24] : memref<4x2x2x64xf32, #tpu.memory_space<vmem>>, vector<1x2x2x64xf32>
    %56 = vector.shape_cast %55 : vector<1x2x2x64xf32> to vector<2x2x64xf32>
    %57 = vector.shape_cast %54 : vector<2x2x64xf32> to vector<1x2x2x64xf32>
    tpu.vector_store %arg8[%c1, %c0_22, %c0_23, %c0_24], %57 {strides = array<i32>} : memref<4x2x2x64xf32, #tpu.memory_space<vmem>>, vector<1x2x2x64xf32>,
    "tpu.trace_start"() <{level = 10 : i32, message = "nrs,nsd->nrd"}> : () -> ()
    %cst_25 = arith.constant dense<0.000000e+00> : vector<4x8x8xf32>
    %58 = tpu.matmul %53, %39, %cst_25 {dimension_numbers = #tpu.dot_dimension_numbers<[2], [1], [1], [2], [0, 0, 0, 1, 1, 2], [0], [0]>} : vector<4x8x8xf32>, vector<4x8x8xf32>, vector<4x8x8xf32> -> vector<4x8x8xf32>
    "tpu.trace_stop"() : () -> ()
    %59 = vector.shape_cast %58 : vector<4x8x8xf32> to vector<32x8xf32>
    %60 = vector.extract_strided_slice %2 {offsets = [0, 16], sizes = [32, 8], strides = [1, 1]} : vector<32x32xf32> to vector<32x8xf32>
    %61 = vector.shape_cast %60 : vector<32x8xf32> to vector<4x8x8xf32>
    %62 = vector.extract_strided_slice %4 {offsets = [0, 16], sizes = [32, 8], strides = [1, 1]} : vector<32x32xf32> to vector<32x8xf32>
    %63 = vector.shape_cast %62 : vector<32x8xf32> to vector<4x8x8xf32>
    %64 = vector.extract_strided_slice %6 {offsets = [0, 16], sizes = [32, 8], strides = [1, 1]} : vector<32x32xf32> to vector<32x8xf32>
    %65 = vector.shape_cast %64 : vector<32x8xf32> to vector<4x8x8xf32>
    "tpu.trace_start"() <{level = 10 : i32, message = "nrd,nsd->nrs"}> : () -> ()
    %cst_26 = arith.constant dense<0.000000e+00> : vector<4x8x8xf32>
    %66 = tpu.matmul %61, %63, %cst_26 {dimension_numbers = #tpu.dot_dimension_numbers<[2], [2], [1], [1], [0, 0, 0, 1, 1, 1], [0], [0]>} : vector<4x8x8xf32>, vector<4x8x8xf32>, vector<4x8x8xf32> -> vector<4x8x8xf32>
    "tpu.trace_stop"() : () -> ()
    %67 = vector.shape_cast %7 : vector<8x8xf32> to vector<1x8x8xf32>
    %68 = vector.broadcast %67 : vector<1x8x8xf32> to vector<4x8x8xf32>
    %69 = arith.addf %66, %68 : vector<4x8x8xf32>
    %cst_27 = arith.constant dense<0xFF800000> : vector<4x8xf32>
    %70 = vector.multi_reduction <maximumf>, %69, %cst_27 [2] : vector<4x8x8xf32> to vector<4x8xf32>
    %71 = vector.shape_cast %70 : vector<4x8xf32> to vector<4x8x1xf32>
    %72 = vector.broadcast %71 : vector<4x8x1xf32> to vector<4x8x8xf32>
    %73 = arith.subf %69, %72 : vector<4x8x8xf32>
    %74 = math.exp %73 : vector<4x8x8xf32>
    %cst_28 = arith.constant dense<0.000000e+00> : vector<4x8xf32>
    %75 = vector.multi_reduction <add>, %74, %cst_28 [2] : vector<4x8x8xf32> to vector<4x8xf32>
    %76 = vector.shape_cast %75 : vector<4x8xf32> to vector<4x8x1xf32>
    %77 = tpu.reciprocal %76 : vector<4x8x1xf32> -> vector<4x8x1xf32>
    %78 = vector.broadcast %77 : vector<4x8x1xf32> to vector<4x8x8xf32>
    %79 = arith.mulf %74, %78 : vector<4x8x8xf32>
    %80 = vector.shape_cast %79 : vector<4x8x8xf32> to vector<2x2x64xf32>
    %c2 = arith.constant 2 : index
    %c0_29 = arith.constant 0 : index
    %c0_30 = arith.constant 0 : index
    %c0_31 = arith.constant 0 : index
    %81 = vector.load %arg8[%c2, %c0_29, %c0_30, %c0_31] : memref<4x2x2x64xf32, #tpu.memory_space<vmem>>, vector<1x2x2x64xf32>
    %82 = vector.shape_cast %81 : vector<1x2x2x64xf32> to vector<2x2x64xf32>
    %83 = vector.shape_cast %80 : vector<2x2x64xf32> to vector<1x2x2x64xf32>
    tpu.vector_store %arg8[%c2, %c0_29, %c0_30, %c0_31], %83 {strides = array<i32>} : memref<4x2x2x64xf32, #tpu.memory_space<vmem>>, vector<1x2x2x64xf32>,
    "tpu.trace_start"() <{level = 10 : i32, message = "nrs,nsd->nrd"}> : () -> ()
    %cst_32 = arith.constant dense<0.000000e+00> : vector<4x8x8xf32>
    %84 = tpu.matmul %79, %65, %cst_32 {dimension_numbers = #tpu.dot_dimension_numbers<[2], [1], [1], [2], [0, 0, 0, 1, 1, 2], [0], [0]>} : vector<4x8x8xf32>, vector<4x8x8xf32>, vector<4x8x8xf32> -> vector<4x8x8xf32>
    "tpu.trace_stop"() : () -> ()
    %85 = vector.shape_cast %84 : vector<4x8x8xf32> to vector<32x8xf32>
    %86 = vector.extract_strided_slice %2 {offsets = [0, 24], sizes = [32, 8], strides = [1, 1]} : vector<32x32xf32> to vector<32x8xf32>
    %87 = vector.shape_cast %86 : vector<32x8xf32> to vector<4x8x8xf32>
    %88 = vector.extract_strided_slice %4 {offsets = [0, 24], sizes = [32, 8], strides = [1, 1]} : vector<32x32xf32> to vector<32x8xf32>
    %89 = vector.shape_cast %88 : vector<32x8xf32> to vector<4x8x8xf32>
    %90 = vector.extract_strided_slice %6 {offsets = [0, 24], sizes = [32, 8], strides = [1, 1]} : vector<32x32xf32> to vector<32x8xf32>
    %91 = vector.shape_cast %90 : vector<32x8xf32> to vector<4x8x8xf32>
    "tpu.trace_start"() <{level = 10 : i32, message = "nrd,nsd->nrs"}> : () -> ()
    %cst_33 = arith.constant dense<0.000000e+00> : vector<4x8x8xf32>
    %92 = tpu.matmul %87, %89, %cst_33 {dimension_numbers = #tpu.dot_dimension_numbers<[2], [2], [1], [1], [0, 0, 0, 1, 1, 1], [0], [0]>} : vector<4x8x8xf32>, vector<4x8x8xf32>, vector<4x8x8xf32> -> vector<4x8x8xf32>
    "tpu.trace_stop"() : () -> ()
    %93 = vector.shape_cast %7 : vector<8x8xf32> to vector<1x8x8xf32>
    %94 = vector.broadcast %93 : vector<1x8x8xf32> to vector<4x8x8xf32>
    %95 = arith.addf %92, %94 : vector<4x8x8xf32>
    %cst_34 = arith.constant dense<0xFF800000> : vector<4x8xf32>
    %96 = vector.multi_reduction <maximumf>, %95, %cst_34 [2] : vector<4x8x8xf32> to vector<4x8xf32>
    %97 = vector.shape_cast %96 : vector<4x8xf32> to vector<4x8x1xf32>
    %98 = vector.broadcast %97 : vector<4x8x1xf32> to vector<4x8x8xf32>
    %99 = arith.subf %95, %98 : vector<4x8x8xf32>
    %100 = math.exp %99 : vector<4x8x8xf32>
    %cst_35 = arith.constant dense<0.000000e+00> : vector<4x8xf32>
    %101 = vector.multi_reduction <add>, %100, %cst_35 [2] : vector<4x8x8xf32> to vector<4x8xf32>
    %102 = vector.shape_cast %101 : vector<4x8xf32> to vector<4x8x1xf32>
    %103 = tpu.reciprocal %102 : vector<4x8x1xf32> -> vector<4x8x1xf32>
    %104 = vector.broadcast %103 : vector<4x8x1xf32> to vector<4x8x8xf32>
    %105 = arith.mulf %100, %104 : vector<4x8x8xf32>
    %106 = vector.shape_cast %105 : vector<4x8x8xf32> to vector<2x2x64xf32>
    %c3 = arith.constant 3 : index
    %c0_36 = arith.constant 0 : index
    %c0_37 = arith.constant 0 : index
    %c0_38 = arith.constant 0 : index
    %107 = vector.load %arg8[%c3, %c0_36, %c0_37, %c0_38] : memref<4x2x2x64xf32, #tpu.memory_space<vmem>>, vector<1x2x2x64xf32>
    %108 = vector.shape_cast %107 : vector<1x2x2x64xf32> to vector<2x2x64xf32>
    %109 = vector.shape_cast %106 : vector<2x2x64xf32> to vector<1x2x2x64xf32>
    tpu.vector_store %arg8[%c3, %c0_36, %c0_37, %c0_38], %109 {strides = array<i32>} : memref<4x2x2x64xf32, #tpu.memory_space<vmem>>, vector<1x2x2x64xf32>,
    "tpu.trace_start"() <{level = 10 : i32, message = "nrs,nsd->nrd"}> : () -> ()
    %cst_39 = arith.constant dense<0.000000e+00> : vector<4x8x8xf32>
    %110 = tpu.matmul %105, %91, %cst_39 {dimension_numbers = #tpu.dot_dimension_numbers<[2], [1], [1], [2], [0, 0, 0, 1, 1, 2], [0], [0]>} : vector<4x8x8xf32>, vector<4x8x8xf32>, vector<4x8x8xf32> -> vector<4x8x8xf32>
    "tpu.trace_stop"() : () -> ()
    %111 = vector.shape_cast %110 : vector<4x8x8xf32> to vector<32x8xf32>
    %112 = tpu.concatenate %33, %59, %85, %111 in 1 : vector<32x8xf32>, vector<32x8xf32>, vector<32x8xf32>, vector<32x8xf32> -> vector<32x32xf32>
    %c0_40 = arith.constant 0 : index
    %c0_41 = arith.constant 0 : index
    %113 = vector.load %arg5[%c0_40, %c0_41] : memref<32x32xf32, #tpu.memory_space<vmem>>, vector<32x32xf32>
    %cst_42 = arith.constant dense<0.000000e+00> : vector<32x32xf32>
    %114 = tpu.matmul %112, %113, %cst_42 {dimension_numbers = #tpu.dot_dimension_numbers<[1], [0], [0], [1], [0, 0, 1, 1], [], []>} : vector<32x32xf32>, vector<32x32xf32>, vector<32x32xf32> -> vector<32x32xf32>
    %c0_43 = arith.constant 0 : index
    %c0_44 = arith.constant 0 : index
    %115 = vector.load %arg7[%c0_43, %c0_44] : memref<32x32xf32, #tpu.memory_space<vmem>>, vector<32x32xf32>
    tpu.vector_store %arg7[%c0_43, %c0_44], %114 {strides = array<i32>} : memref<32x32xf32, #tpu.memory_space<vmem>>, vector<32x32xf32>,
    return
  }
  func.func @transform_0(%arg0: i32) -> (i32, i32) {
    %c0_i32 = arith.constant 0 : i32
    %c0_i32_0 = arith.constant 0 : i32
    return %arg0, %c0_i32 : i32, i32
  }
  func.func @transform_1(%arg0: i32) -> (i32, i32) {
    %c0_i32 = arith.constant 0 : i32
    %c0_i32_0 = arith.constant 0 : i32
    %c0_i32_1 = arith.constant 0 : i32
    return %c0_i32, %c0_i32_0 : i32, i32
  }
  func.func @transform_2(%arg0: i32) -> (i32, i32) {
    %c0_i32 = arith.constant 0 : i32
    %c0_i32_0 = arith.constant 0 : i32
    %c0_i32_1 = arith.constant 0 : i32
    return %c0_i32, %c0_i32_0 : i32, i32
  }
  func.func @transform_3(%arg0: i32) -> (i32, i32) {
    %c0_i32 = arith.constant 0 : i32
    %c0_i32_0 = arith.constant 0 : i32
    %c0_i32_1 = arith.constant 0 : i32
    return %c0_i32, %c0_i32_0 : i32, i32
  }
  func.func @transform_4(%arg0: i32) -> (i32, i32) {
    %c0_i32 = arith.constant 0 : i32
    %c0_i32_0 = arith.constant 0 : i32
    %c0_i32_1 = arith.constant 0 : i32
    return %c0_i32, %c0_i32_0 : i32, i32
  }
  func.func @transform_5(%arg0: i32) -> (i32, i32) {
    %c0_i32 = arith.constant 0 : i32
    %c0_i32_0 = arith.constant 0 : i32
    %c0_i32_1 = arith.constant 0 : i32
    return %c0_i32, %c0_i32_0 : i32, i32
  }
  func.func @transform_6(%arg0: i32) -> (i32, i32) {
    %c0_i32 = arith.constant 0 : i32
    %c0_i32_0 = arith.constant 0 : i32
    return %arg0, %c0_i32 : i32, i32
  }
  func.func @transform_7(%arg0: i32) -> (i32, i32, i32, i32) {
    %c0_i32 = arith.constant 0 : i32
    %c0_i32_0 = arith.constant 0 : i32
    %c0_i32_1 = arith.constant 0 : i32
    %c0_i32_2 = arith.constant 0 : i32
    return %c0_i32, %arg0, %c0_i32_0, %c0_i32_1 : i32, i32, i32, i32
  }
}

</mosaic_0001>

<llo_original>
// kernel: tpu_custom_call.1
$region0: #{tpu_custom_call.1}
  #allocation0 [shape = 'u32[]', space=smem, size = 0x4, offset = 0x4, fixed_abs, tag = 'smem constant byte address 0x4 - core index']
  #allocation1 [shape = 'u32[72,128]{1,0:T(1,128)}', space=vmem, size = 0x9000, scoped, tag = 'internal scratch']
  #allocation8 [shape = 's32[]', space=sflag, size = 0x4, offset = 0, fixed_abs, tag = 'sflag constant byte address 0x0 - dummy sync flag']
  %s0 = inlined_call_operand.vmem [shape: f32[64,32], index: 0, kind: input, shape index: {}]
  %s1 = inlined_call_operand.vmem [shape: f32[32,32], index: 1, kind: input, shape index: {}]
  %s2 = inlined_call_operand.vmem [shape: f32[32,32], index: 2, kind: input, shape index: {}]
  %s3 = inlined_call_operand.vmem [shape: f32[32,32], index: 3, kind: input, shape index: {}]
  %s4 = inlined_call_operand.hbm [shape: f32[32,32], index: 4, kind: input, shape index: {}]
  %s5 = inlined_call_operand.hbm [shape: f32[8,8], index: 5, kind: input, shape index: {}]
  %s6 = inlined_call_operand.vmem [shape: f32[64,32], index: 6, kind: output, shape index: {0}]
  %s7 = inlined_call_operand.hbm [shape: f32[4,4,2,64], index: 7, kind: output, shape index: {1}]
  %8 = xla_tuple %s6, %s7
  %s9 = sld [smem:[#allocation0]]
  $region73: #{tpu_custom_call.1} parent=0
    _
  %s11 = ssub.s32 1, %s9
  %s12 = scalar_select 0, %s11, %s9
  $region1: #{tpu_custom_call.1} parent=0
    #allocation2 [shape = 'u8[16384]{0}', space=vmem, size = 0x4000, scoped, tag = 'input window, operand 4, single buffered']
    #allocation3 [shape = 's32[2]{0}', space=sflag, size = 0x8, scoped, tag = 'scoped memory for tpu_custom_call.1']
    #allocation4 [shape = 's32[2]{0}', space=sflag, size = 0x8, scoped, tag = 'scoped memory for tpu_custom_call.1']
    #allocation5 [shape = 'u8[4096]{0}', space=vmem, size = 0x1000, scoped, tag = 'input window, operand 5, single buffered']
    #allocation6 [shape = 's32[1]{0}', space=sflag, size = 0x4, scoped, tag = 'scoped memory for tpu_custom_call.1']
    #allocation7 [shape = 'u8[16384]{0}', space=vmem, size = 0x4000, scoped, tag = 'output window, operand 1']
    %13 = vsyncpa [#allocation3], 0
    %14 = vsyncpa [#allocation6], 0
    %15 = vsyncpa [#allocation4], 0
    %s16 = scalar_lea.sflag [#allocation4], 1
    %17 = vsyncpa %s16, 0
    loop: start=0, step=1, limit=4
    $region2: #{tpu_custom_call.1} parent=1 // loop_pre_header
      _
    $region3: #{tpu_custom_call.1} parent=1 // loop_header
      %s19 = sphi 0, %s23
      %p20 = scmp.ge.s32.totalorder %s19, 4
      %s29 = sphi 0, %s31
      %s32 = sphi 0, %s29
      %s33 = sphi 0, %s32
      %s49 = sphi 0, %s33
      %s53 = sphi 0, %s53
      %s55 = sphi 0, %s53
      %s56 = sphi 0, %s55
      %s70 = sphi 0, %s56
      %s74 = sphi 0, %s74
      %s76 = sphi 0, %s74
      %s77 = sphi 0, %s76
      %s91 = sphi 0, %s77
      %s95 = sphi 0, %s95
      %s97 = sphi 0, %s95
      %s98 = sphi 0, %s97
      %s112 = sphi 0, %s98
      %s116 = sphi 0, %s116
      %s118 = sphi 0, %s116
      %s119 = sphi 0, %s118
      %s133 = sphi 0, %s119
      %s137 = sphi 0, %s137
      %s139 = sphi 0, %s137
      %s140 = sphi 0, %s139
      %s154 = sphi 0, %s140
      %s160 = sphi 0, %s162
      %s163 = sphi 0, %s160
      %s164 = sphi 0, %s163
      %s180 = sphi 0, %s164
      %s186 = sphi 0, %s188
      %s189 = sphi 0, %s186
      %s190 = sphi 0, %s189
      %s206 = sphi 0, %s190
    $region4: #{tpu_custom_call.1} parent=1 // loop_header_branch
      %22 = sbr.rel (%p20) target = $region8
    $region5: #{tpu_custom_call.1} parent=1 // loop_body
      %s24 = ssub.s32 %s19, 1
      %s25 = ssub.s32 %s19, 2
      %s26 = sadd.s32 %s19, 1
      %s27 = ssub.s32 %s19, %s26
      %p28 = scmp.eq.s32.totalorder %s27, 0
      %s30 = sadd.s32 %s29, 1
      %s31 = scalar_select %p28, %s29, %s30
      %p34 = pneg %p28
      %p35 = scmp.eq.s32.totalorder %s19, 1
      %p36 = por %p34, %p35
      %p37 = scmp.ne.s32.totalorder %s29, %s32
      %p38 = scmp.eq.s32.totalorder %s19, 0
      %p39 = por %p37, %p38
      %p40 = scmp.ne.s32.totalorder %s29, %s32
      %p41 = scmp.eq.s32.totalorder %s24, 1
      %p42 = por %p40, %p41
      %p43 = scmp.ne.s32.totalorder %s32, %s33
      %p44 = scmp.eq.s32.totalorder %s24, 0
      %p45 = por %p43, %p44
      %p46 = scmp.ne.s32.totalorder %s32, %s33
      %p47 = scmp.eq.s32.totalorder %s25, 1
      %p48 = por %p46, %p47
      %p50 = scmp.ne.s32.totalorder %s33, %s49
      %p51 = scmp.eq.s32.totalorder %s25, 0
      %p52 = por %p50, %p51
      %s54 = sadd.s32 %s53, 1
      %p57 = scmp.eq.s32.totalorder %s19, 1
      %p58 = scmp.ne.s32.totalorder %s53, %s55
      %p59 = scmp.eq.s32.totalorder %s19, 0
      %p60 = por %p58, %p59
      %p61 = scmp.ne.s32.totalorder %s53, %s55
      %p62 = scmp.eq.s32.totalorder %s24, 1
      %p63 = por %p61, %p62
      %p64 = scmp.ne.s32.totalorder %s55, %s56
      %p65 = scmp.eq.s32.totalorder %s24, 0
      %p66 = por %p64, %p65
      %p67 = scmp.ne.s32.totalorder %s55, %s56
      %p68 = scmp.eq.s32.totalorder %s25, 1
      %p69 = por %p67, %p68
      %p71 = scmp.ne.s32.totalorder %s56, %s70
      %p72 = scmp.eq.s32.totalorder %s25, 0
      %p73 = por %p71, %p72
      %s75 = sadd.s32 %s74, 1
      %p78 = scmp.eq.s32.totalorder %s19, 1
      %p79 = scmp.ne.s32.totalorder %s74, %s76
      %p80 = scmp.eq.s32.totalorder %s19, 0
      %p81 = por %p79, %p80
      %p82 = scmp.ne.s32.totalorder %s74, %s76
      %p83 = scmp.eq.s32.totalorder %s24, 1
      %p84 = por %p82, %p83
      %p85 = scmp.ne.s32.totalorder %s76, %s77
      %p86 = scmp.eq.s32.totalorder %s24, 0
      %p87 = por %p85, %p86
      %p88 = scmp.ne.s32.totalorder %s76, %s77
      %p89 = scmp.eq.s32.totalorder %s25, 1
      %p90 = por %p88, %p89
      %p92 = scmp.ne.s32.totalorder %s77, %s91
      %p93 = scmp.eq.s32.totalorder %s25, 0
      %p94 = por %p92, %p93
      %s96 = sadd.s32 %s95, 1
      %p99 = scmp.eq.s32.totalorder %s19, 1
      %p100 = scmp.ne.s32.totalorder %s95, %s97
      %p101 = scmp.eq.s32.totalorder %s19, 0
      %p102 = por %p100, %p101
      %p103 = scmp.ne.s32.totalorder %s95, %s97
      %p104 = scmp.eq.s32.totalorder %s24, 1
      %p105 = por %p103, %p104
      %p106 = scmp.ne.s32.totalorder %s97, %s98
      %p107 = scmp.eq.s32.totalorder %s24, 0
      %p108 = por %p106, %p107
      %p109 = scmp.ne.s32.totalorder %s97, %s98
      %p110 = scmp.eq.s32.totalorder %s25, 1
      %p111 = por %p109, %p110
      %p113 = scmp.ne.s32.totalorder %s98, %s112
      %p114 = scmp.eq.s32.totalorder %s25, 0
      %p115 = por %p113, %p114
      %s117 = sadd.s32 %s116, 1
      %p120 = scmp.eq.s32.totalorder %s19, 1
      %p121 = scmp.ne.s32.totalorder %s116, %s118
      %p122 = scmp.eq.s32.totalorder %s19, 0
      %p123 = por %p121, %p122
      %p124 = scmp.ne.s32.totalorder %s116, %s118
      %p125 = scmp.eq.s32.totalorder %s24, 1
      %p126 = por %p124, %p125
      %p127 = scmp.ne.s32.totalorder %s118, %s119
      %p128 = scmp.eq.s32.totalorder %s24, 0
      %p129 = por %p127, %p128
      %p130 = scmp.ne.s32.totalorder %s118, %s119
      %p131 = scmp.eq.s32.totalorder %s25, 1
      %p132 = por %p130, %p131
      %p134 = scmp.ne.s32.totalorder %s119, %s133
      %p135 = scmp.eq.s32.totalorder %s25, 0
      %p136 = por %p134, %p135
      %s138 = sadd.s32 %s137, 1
      %p141 = scmp.eq.s32.totalorder %s19, 1
      %p142 = scmp.ne.s32.totalorder %s137, %s139
      %p143 = scmp.eq.s32.totalorder %s19, 0
      %p144 = por %p142, %p143
      %p145 = scmp.ne.s32.totalorder %s137, %s139
      %p146 = scmp.eq.s32.totalorder %s24, 1
      %p147 = por %p145, %p146
      %p148 = scmp.ne.s32.totalorder %s139, %s140
      %p149 = scmp.eq.s32.totalorder %s24, 0
      %p150 = por %p148, %p149
      %p151 = scmp.ne.s32.totalorder %s139, %s140
      %p152 = scmp.eq.s32.totalorder %s25, 1
      %p153 = por %p151, %p152
      %p155 = scmp.ne.s32.totalorder %s140, %s154
      %p156 = scmp.eq.s32.totalorder %s25, 0
      %p157 = por %p155, %p156
      %s158 = ssub.s32 %s19, %s26
      %p159 = scmp.eq.s32.totalorder %s158, 0
      %s161 = sadd.s32 %s160, 1
      %s162 = scalar_select %p159, %s160, %s161
      %p165 = pneg %p159
      %p166 = scmp.eq.s32.totalorder %s19, 1
      %p167 = por %p165, %p166
      %p168 = scmp.ne.s32.totalorder %s160, %s163
      %p169 = scmp.eq.s32.totalorder %s19, 0
      %p170 = por %p168, %p169
      %p171 = scmp.ne.s32.totalorder %s160, %s163
      %p172 = scmp.eq.s32.totalorder %s24, 1
      %p173 = por %p171, %p172
      %p174 = scmp.ne.s32.totalorder %s163, %s164
      %p175 = scmp.eq.s32.totalorder %s24, 0
      %p176 = por %p174, %p175
      %p177 = scmp.ne.s32.totalorder %s163, %s164
      %p178 = scmp.eq.s32.totalorder %s25, 1
      %p179 = por %p177, %p178
      %p181 = scmp.ne.s32.totalorder %s164, %s180
      %p182 = scmp.eq.s32.totalorder %s25, 0
      %p183 = por %p181, %p182
      %s184 = ssub.s32 %s19, %s26
      %p185 = scmp.eq.s32.totalorder %s184, 0
      %s187 = sadd.s32 %s186, 1
      %s188 = scalar_select %p185, %s186, %s187
      %p191 = pneg %p185
      %p192 = scmp.eq.s32.totalorder %s19, 1
      %p193 = por %p191, %p192
      %p194 = scmp.ne.s32.totalorder %s186, %s189
      %p195 = scmp.eq.s32.totalorder %s19, 0
      %p196 = por %p194, %p195
      %p197 = scmp.ne.s32.totalorder %s186, %s189
      %p198 = scmp.eq.s32.totalorder %s24, 1
      %p199 = por %p197, %p198
      %p200 = scmp.ne.s32.totalorder %s189, %s190
      %p201 = scmp.eq.s32.totalorder %s24, 0
      %p202 = por %p200, %p201
      %p203 = scmp.ne.s32.totalorder %s189, %s190
      %p204 = scmp.eq.s32.totalorder %s25, 1
      %p205 = por %p203, %p204
      %p207 = scmp.ne.s32.totalorder %s190, %s206
      %p208 = scmp.eq.s32.totalorder %s25, 0
      %p209 = por %p207, %p208
      %p210 = scmp.le.s32.totalorder 1, %s19
      %p211 = scmp.lt.s32.totalorder %s19, 3
      %p212 = pnand %p210, %p211
      %p213 = pneg %p212
      // Predicated region
      $region9: #{tpu_custom_call.1} parent=5 // pred_check
        _
      $region10: #{tpu_custom_call.1} parent=5 // pred_check_branch
        %215 = sbr.rel (%p212) target = $region12
      $region11: #{tpu_custom_call.1} parent=5 // pred_region
        %s216 = ssub.s32 %s19, 1
        // Predicated region
        $region13: #{tpu_custom_call.1} parent=11 // pred_check
          %p217 = pneg %p66
        $region14: #{tpu_custom_call.1} parent=11 // pred_check_branch
          %219 = sbr.rel (%p217) target = $region16
        $region15: #{tpu_custom_call.1} parent=11 // pred_region
          _
        $region16: #{tpu_custom_call.1} parent=11 // pred_fallthru
          _
        // Predicated region
        $region17: #{tpu_custom_call.1} parent=11 // pred_check
          %p220 = pneg %p87
        $region18: #{tpu_custom_call.1} parent=11 // pred_check_branch
          %222 = sbr.rel (%p220) target = $region20
        $region19: #{tpu_custom_call.1} parent=11 // pred_region
          _
        $region20: #{tpu_custom_call.1} parent=11 // pred_fallthru
          _
        // Predicated region
        $region21: #{tpu_custom_call.1} parent=11 // pred_check
          %p223 = pneg %p108
        $region22: #{tpu_custom_call.1} parent=11 // pred_check_branch
          %225 = sbr.rel (%p223) target = $region24
        $region23: #{tpu_custom_call.1} parent=11 // pred_region
          _
        $region24: #{tpu_custom_call.1} parent=11 // pred_fallthru
          _
        // Predicated region
        $region25: #{tpu_custom_call.1} parent=11 // pred_check
          %p226 = pneg %p129
        $region26: #{tpu_custom_call.1} parent=11 // pred_check_branch
          %228 = sbr.rel (%p226) target = $region28
        $region27: #{tpu_custom_call.1} parent=11 // pred_region
          %230 = vsyncadd [#allocation3], 0
          %s231 = sshll.u32 %s4, 4
          %s232 = int_to_ptr.hbm [resolvable:$true] %s231
          %s233 = sshll.u32 [#allocation2], 4
          %s234 = int_to_ptr.vmem [resolvable:$true] %s233
          %239 = dma.hbm_to_vmem [thread:$0]  %s232, 512, %s234, [#allocation3], 128, 128, 8
        $region28: #{tpu_custom_call.1} parent=11 // pred_fallthru
          _
        // Predicated region
        $region29: #{tpu_custom_call.1} parent=11 // pred_check
          %p240 = pneg %p150
        $region30: #{tpu_custom_call.1} parent=11 // pred_check_branch
          %242 = sbr.rel (%p240) target = $region32
        $region31: #{tpu_custom_call.1} parent=11 // pred_region
          %244 = vsyncadd [#allocation6], 0
          %s246 = sshll.u32 %s5, 4
          %s247 = int_to_ptr.hbm [resolvable:$true] %s246
          %s248 = sshll.u32 [#allocation5], 4
          %s249 = int_to_ptr.vmem [resolvable:$true] %s248
          %251 = dma.hbm_to_vmem [thread:$0]  %s247, 128, %s249, [#allocation6]
        $region32: #{tpu_custom_call.1} parent=11 // pred_fallthru
          _
      $region12: #{tpu_custom_call.1} parent=5 // pred_fallthru
        _
      %p252 = scmp.lt.s32.totalorder %s19, 2
      // Predicated region
      $region33: #{tpu_custom_call.1} parent=5 // pred_check
        %p253 = pneg %p252
      $region34: #{tpu_custom_call.1} parent=5 // pred_check_branch
        %255 = sbr.rel (%p253) target = $region36
      $region35: #{tpu_custom_call.1} parent=5 // pred_region
        // Predicated region
        $region37: #{tpu_custom_call.1} parent=35 // pred_check
          %p256 = pneg %p39
        $region38: #{tpu_custom_call.1} parent=35 // pred_check_branch
          %258 = sbr.rel (%p256) target = $region40
        $region39: #{tpu_custom_call.1} parent=35 // pred_region
          %s259 = smul.u32 4, %s19
          %p260 = scmp.lt.s32.totalorder %s259, 7
          %s261 = scalar_select %p260, %s259, 7
          %s262 = smul.addr %s261, 8
          %s263 = scalar_lea.vmem %s0, %s262
          %s264 = smul.u32 4, %s19
        $region40: #{tpu_custom_call.1} parent=35 // pred_fallthru
          _
      $region36: #{tpu_custom_call.1} parent=5 // pred_fallthru
        _
      %p265 = scmp.le.s32.totalorder 1, %s19
      %p266 = scmp.lt.s32.totalorder %s19, 3
      %p267 = pnand %p265, %p266
      %p268 = pneg %p267
      // Predicated region
      $region41: #{tpu_custom_call.1} parent=5 // pred_check
        _
      $region42: #{tpu_custom_call.1} parent=5 // pred_check_branch
        %270 = sbr.rel (%p267) target = $region44
      $region43: #{tpu_custom_call.1} parent=5 // pred_region
        %s271 = ssub.s32 %s19, 1
        // Predicated region
        $region45: #{tpu_custom_call.1} parent=43 // pred_check
          %p272 = pneg %p129
        $region46: #{tpu_custom_call.1} parent=43 // pred_check_branch
          %274 = sbr.rel (%p272) target = $region48
        $region47: #{tpu_custom_call.1} parent=43 // pred_region
          %276 = dma.done [#allocation3], 512
        $region48: #{tpu_custom_call.1} parent=43 // pred_fallthru
          _
        // Predicated region
        $region49: #{tpu_custom_call.1} parent=43 // pred_check
          %p277 = pneg %p150
        $region50: #{tpu_custom_call.1} parent=43 // pred_check_branch
          %279 = sbr.rel (%p277) target = $region52
        $region51: #{tpu_custom_call.1} parent=43 // pred_region
          %281 = dma.done [#allocation6], 128
        $region52: #{tpu_custom_call.1} parent=43 // pred_fallthru
          _
        %s282 = smul.u32 4, %s24
        %p283 = scmp.lt.s32.totalorder %s282, 7
        %s284 = scalar_select %p283, %s282, 7
        %s285 = smul.addr %s284, 8
        %s286 = scalar_lea.vmem %s0, %s285
        %p287 = pneg %p45
        %p288 = pneg %p42
        %p289 = pneg %p66
        %p290 = pneg %p63
        %p291 = pneg %p87
        %p292 = pneg %p84
        %p293 = pneg %p108
        %p294 = pneg %p105
        %p295 = pneg %p129
        %p296 = pneg %p126
        %p297 = pneg %p150
        %p298 = pneg %p147
        %p299 = pneg %p176
        %p300 = pneg %p173
        %s301 = smul.u32 4, %s24
        %p302 = scmp.lt.s32.totalorder %s301, 7
        %s303 = scalar_select %p302, %s301, 7
        %s304 = smul.addr %s303, 8
        %s305 = scalar_lea.vmem %s6, %s304
        %p306 = pneg %p202
        %p307 = pneg %p199
        %s308 = sand.u32 %s189, 1
        %s309 = scalar_lea.sflag [#allocation4], %s308
        %s310 = sand.u32 %s189, 1
        %s311 = smul.addr %s310, 16
        %s312 = scalar_lea.vmem [#allocation7], %s311
        %s313 = smul.u32 4, %s24
        %p314 = scmp.lt.s32.totalorder %s313, 7
        %s315 = scalar_select %p314, %s313, 7
        %s316 = smul.addr %s315, 8
        %s317 = scalar_lea.vmem %s0, %s316
        %s318 = smul.u32 4, %s24
        %s319 = smul.u32 4, %s24
        %p320 = scmp.lt.s32.totalorder %s319, 7
        %s321 = scalar_select %p320, %s319, 7
        %s322 = smul.addr %s321, 8
        %s323 = scalar_lea.vmem %s6, %s322
        %s324 = smul.u32 4, %s24
        %s325 = smul.u32 2, %s24
        %v326 = vld [vmem:[%s317] sm:$0xff]
        %v327 = vld [vmem:[%s317 + $0x8] sm:$0xff]
        %v328 = vld [vmem:[%s317 + $0x10] sm:$0xff]
        %v329 = vld [vmem:[%s317 + $0x18] sm:$0xff]
        %v330 = vld [vmem:[%s1] sm:$0xff]
        %v331 = vld [vmem:[%s1 + $0x8] sm:$0xff]
        %v332 = vld [vmem:[%s1 + $0x10] sm:$0xff]
        %v333 = vld [vmem:[%s1 + $0x18] sm:$0xff]
        %vm334 = vcmask 261120
        %v336 = vsel %vm334, %v326, 0
        %v339 = vsel %vm334, %v327, 0
        %v342 = vsel %vm334, %v328, 0
        %v345 = vsel %vm334, %v329, 0
        %347 = vmatpush.msra.mxu0 0.0
        %348 = vmatpush.msra.mxu0 0.0
        %349 = vmatpush.msra.mxu0 0.0
        %350 = vmatpush.msra.mxu0 0.0
        %351 = vmatpush.msra.mxu0 0.0
        %352 = vmatpush.msra.mxu0 0.0
        %353 = vmatpush.msra.mxu0 0.0
        %354 = vmatpush.msra.mxu0 0.0
        %355 = vmatpush.msra.mxu0 0.0
        %356 = vmatpush.msra.mxu0 0.0
        %357 = vmatpush.msra.mxu0 0.0
        %358 = vmatpush.msra.mxu0 0.0
        %359 = vmatpush.msra.mxu0 %v333
        %360 = vmatpush.msra.mxu0 %v332
        %361 = vmatpush.msra.mxu0 %v331
        %362 = vmatpush.msra.mxu0 %v330
        %363 = vmatmul.f32.gmra.mxu0 %v336
        %v364 = vpop.f32.mrf.mxu0
        %v365 = vadd.f32 0.0, %v364
        %366 = vmatmul.f32.gmra.mxu0 %v339
        %v367 = vpop.f32.mrf.mxu0
        %v368 = vadd.f32 0.0, %v367
        %369 = vmatmul.f32.gmra.mxu0 %v342
        %v370 = vpop.f32.mrf.mxu0
        %v371 = vadd.f32 0.0, %v370
        %372 = vmatmul.f32.gmra.mxu0 %v345
        %v373 = vpop.f32.mrf.mxu0
        %v374 = vadd.f32 0.0, %v373
        %375 = vdwg.mxu0
        %v376 = vld [vmem:[%s2] sm:$0xff]
        %v377 = vld [vmem:[%s2 + $0x8] sm:$0xff]
        %v378 = vld [vmem:[%s2 + $0x10] sm:$0xff]
        %v379 = vld [vmem:[%s2 + $0x18] sm:$0xff]
        %380 = vmatpush.msra.mxu0 0.0
        %381 = vmatpush.msra.mxu0 0.0
        %382 = vmatpush.msra.mxu0 0.0
        %383 = vmatpush.msra.mxu0 0.0
        %384 = vmatpush.msra.mxu0 0.0
        %385 = vmatpush.msra.mxu0 0.0
        %386 = vmatpush.msra.mxu0 0.0
        %387 = vmatpush.msra.mxu0 0.0
        %388 = vmatpush.msra.mxu0 0.0
        %389 = vmatpush.msra.mxu0 0.0
        %390 = vmatpush.msra.mxu0 0.0
        %391 = vmatpush.msra.mxu0 0.0
        %392 = vmatpush.msra.mxu0 %v379
        %393 = vmatpush.msra.mxu0 %v378
        %394 = vmatpush.msra.mxu0 %v377
        %395 = vmatpush.msra.mxu0 %v376
        %396 = vmatmul.f32.gmra.mxu0 %v336
        %v397 = vpop.f32.mrf.mxu0
        %v398 = vadd.f32 0.0, %v397
        %399 = vmatmul.f32.gmra.mxu0 %v339
        %v400 = vpop.f32.mrf.mxu0
        %v401 = vadd.f32 0.0, %v400
        %402 = vmatmul.f32.gmra.mxu0 %v342
        %v403 = vpop.f32.mrf.mxu0
        %v404 = vadd.f32 0.0, %v403
        %405 = vmatmul.f32.gmra.mxu0 %v345
        %v406 = vpop.f32.mrf.mxu0
        %v407 = vadd.f32 0.0, %v406
        %408 = vdwg.mxu0
        %v409 = vld [vmem:[%s3] sm:$0xff]
        %v410 = vld [vmem:[%s3 + $0x8] sm:$0xff]
        %v411 = vld [vmem:[%s3 + $0x10] sm:$0xff]
        %v412 = vld [vmem:[%s3 + $0x18] sm:$0xff]
        %413 = vmatpush.msra.mxu0 0.0
        %414 = vmatpush.msra.mxu0 0.0
        %415 = vmatpush.msra.mxu0 0.0
        %416 = vmatpush.msra.mxu0 0.0
        %417 = vmatpush.msra.mxu0 0.0
        %418 = vmatpush.msra.mxu0 0.0
        %419 = vmatpush.msra.mxu0 0.0
        %420 = vmatpush.msra.mxu0 0.0
        %421 = vmatpush.msra.mxu0 0.0
        %422 = vmatpush.msra.mxu0 0.0
        %423 = vmatpush.msra.mxu0 0.0
        %424 = vmatpush.msra.mxu0 0.0
        %425 = vmatpush.msra.mxu0 %v412
        %426 = vmatpush.msra.mxu0 %v411
        %427 = vmatpush.msra.mxu0 %v410
        %428 = vmatpush.msra.mxu0 %v409
        %429 = vmatmul.f32.gmra.mxu0 %v336
        %v430 = vpop.f32.mrf.mxu0
        %v431 = vadd.f32 0.0, %v430
        %432 = vmatmul.f32.gmra.mxu0 %v339
        %v433 = vpop.f32.mrf.mxu0
        %v434 = vadd.f32 0.0, %v433
        %435 = vmatmul.f32.gmra.mxu0 %v342
        %v436 = vpop.f32.mrf.mxu0
        %v437 = vadd.f32 0.0, %v436
        %438 = vmatmul.f32.gmra.mxu0 %v345
        %v439 = vpop.f32.mrf.mxu0
        %v440 = vadd.f32 0.0, %v439
        %441 = vdwg.mxu0
        %v442 = vld [vmem:[#allocation5] sm:$0xff]
        %vm443 = vcmask 64512
        %v445 = vsel %vm443, %v365, 0
        %v448 = vsel %vm443, %v398, 0
        %450 = vmatpush.xpose.msra.mxu0 0.0
        %451 = vmatpush.xpose.msra.mxu0 0.0
        %452 = vmatpush.xpose.msra.mxu0 0.0
        %453 = vmatpush.xpose.msra.mxu0 0.0
        %454 = vmatpush.xpose.msra.mxu0 0.0
        %455 = vmatpush.xpose.msra.mxu0 0.0
        %456 = vmatpush.xpose.msra.mxu0 0.0
        %457 = vmatpush.xpose.msra.mxu0 0.0
        %458 = vmatpush.xpose.msra.mxu0 0.0
        %459 = vmatpush.xpose.msra.mxu0 0.0
        %460 = vmatpush.xpose.msra.mxu0 0.0
        %461 = vmatpush.xpose.msra.mxu0 0.0
        %462 = vmatpush.xpose.msra.mxu0 0.0
        %463 = vmatpush.xpose.msra.mxu0 0.0
        %464 = vmatpush.xpose.msra.mxu0 0.0
        %465 = vmatpush.xpose.msra.mxu0 %v448
        %466 = vmatmul.f32.gmra.mxu0 %v445
        %v467 = vpop.f32.mrf.mxu0
        %v468 = vadd.f32 %v442, %v467
        %469 = vdwg.mxu0
        %v471 = vsel %vm443, %v368, 0
        %v474 = vsel %vm443, %v401, 0
        %476 = vmatpush.xpose.msra.mxu0 0.0
        %477 = vmatpush.xpose.msra.mxu0 0.0
        %478 = vmatpush.xpose.msra.mxu0 0.0
        %479 = vmatpush.xpose.msra.mxu0 0.0
        %480 = vmatpush.xpose.msra.mxu0 0.0
        %481 = vmatpush.xpose.msra.mxu0 0.0
        %482 = vmatpush.xpose.msra.mxu0 0.0
        %483 = vmatpush.xpose.msra.mxu0 0.0
        %484 = vmatpush.xpose.msra.mxu0 0.0
        %485 = vmatpush.xpose.msra.mxu0 0.0
        %486 = vmatpush.xpose.msra.mxu0 0.0
        %487 = vmatpush.xpose.msra.mxu0 0.0
        %488 = vmatpush.xpose.msra.mxu0 0.0
        %489 = vmatpush.xpose.msra.mxu0 0.0
        %490 = vmatpush.xpose.msra.mxu0 0.0
        %491 = vmatpush.xpose.msra.mxu0 %v474
        %492 = vmatmul.f32.gmra.mxu0 %v471
        %v493 = vpop.f32.mrf.mxu0
        %v494 = vadd.f32 %v442, %v493
        %495 = vdwg.mxu0
        %v497 = vsel %vm443, %v371, 0
        %v500 = vsel %vm443, %v404, 0
        %502 = vmatpush.xpose.msra.mxu0 0.0
        %503 = vmatpush.xpose.msra.mxu0 0.0
        %504 = vmatpush.xpose.msra.mxu0 0.0
        %505 = vmatpush.xpose.msra.mxu0 0.0
        %506 = vmatpush.xpose.msra.mxu0 0.0
        %507 = vmatpush.xpose.msra.mxu0 0.0
        %508 = vmatpush.xpose.msra.mxu0 0.0
        %509 = vmatpush.xpose.msra.mxu0 0.0
        %510 = vmatpush.xpose.msra.mxu0 0.0
        %511 = vmatpush.xpose.msra.mxu0 0.0
        %512 = vmatpush.xpose.msra.mxu0 0.0
        %513 = vmatpush.xpose.msra.mxu0 0.0
        %514 = vmatpush.xpose.msra.mxu0 0.0
        %515 = vmatpush.xpose.msra.mxu0 0.0
        %516 = vmatpush.xpose.msra.mxu0 0.0
        %517 = vmatpush.xpose.msra.mxu0 %v500
        %518 = vmatmul.f32.gmra.mxu0 %v497
        %v519 = vpop.f32.mrf.mxu0
        %v520 = vadd.f32 %v442, %v519
        %521 = vdwg.mxu0
        %v523 = vsel %vm443, %v374, 0
        %v526 = vsel %vm443, %v407, 0
        %528 = vmatpush.xpose.msra.mxu0 0.0
        %529 = vmatpush.xpose.msra.mxu0 0.0
        %530 = vmatpush.xpose.msra.mxu0 0.0
        %531 = vmatpush.xpose.msra.mxu0 0.0
        %532 = vmatpush.xpose.msra.mxu0 0.0
        %533 = vmatpush.xpose.msra.mxu0 0.0
        %534 = vmatpush.xpose.msra.mxu0 0.0
        %535 = vmatpush.xpose.msra.mxu0 0.0
        %536 = vmatpush.xpose.msra.mxu0 0.0
        %537 = vmatpush.xpose.msra.mxu0 0.0
        %538 = vmatpush.xpose.msra.mxu0 0.0
        %539 = vmatpush.xpose.msra.mxu0 0.0
        %540 = vmatpush.xpose.msra.mxu0 0.0
        %541 = vmatpush.xpose.msra.mxu0 0.0
        %542 = vmatpush.xpose.msra.mxu0 0.0
        %543 = vmatpush.xpose.msra.mxu0 %v526
        %544 = vmatmul.f32.gmra.mxu0 %v523
        %v545 = vpop.f32.mrf.mxu0
        %v546 = vadd.f32 %v442, %v545
        %547 = vdwg.mxu0
        %v548 = vsel %vm443, %v468, -inf
        %549 = vmax.xlane.f32.xlu0 %v548
        %v550 = vpop.xlane.xlu0 %549
        %v551 = vsel %vm443, %v494, -inf
        %552 = vmax.xlane.f32.xlu0 %v551
        %v553 = vpop.xlane.xlu0 %552
        %v554 = vsel %vm443, %v520, -inf
        %555 = vmax.xlane.f32.xlu0 %v554
        %v556 = vpop.xlane.xlu0 %555
        %v557 = vsel %vm443, %v546, -inf
        %558 = vmax.xlane.f32.xlu0 %v557
        %v559 = vpop.xlane.xlu0 %558
        %v560 = vsub.f32 %v468, %v550
        %v561 = vsub.f32 %v494, %v553
        %v562 = vsub.f32 %v520, %v556
        %v563 = vsub.f32 %v546, %v559
        %v564 = vmul.f32 %v560, 1.442695
        %v565 = vpow.pop %v564
        %v566 = vmul.f32 %v561, 1.442695
        %v567 = vpow.pop %v566
        %v568 = vmul.f32 %v562, 1.442695
        %v569 = vpow.pop %v568
        %v570 = vmul.f32 %v563, 1.442695
        %v571 = vpow.pop %v570
        %v572 = vsel %vm443, %v565, 0.0
        %573 = vadd.xlane.f32.xlu0 %v572
        %v574 = vpop.xlane.xlu0 %573
        %v575 = vsel %vm443, %v567, 0.0
        %576 = vadd.xlane.f32.xlu0 %v575
        %v577 = vpop.xlane.xlu0 %576
        %v578 = vsel %vm443, %v569, 0.0
        %579 = vadd.xlane.f32.xlu0 %v578
        %v580 = vpop.xlane.xlu0 %579
        %v581 = vsel %vm443, %v571, 0.0
        %582 = vadd.xlane.f32.xlu0 %v581
        %v583 = vpop.xlane.xlu0 %582
        %v584 = vrcp.pop %v574
        %v585 = vmul.f32 %v574, %v584
        %v586 = vsub.f32 1.0, %v585
        %v587 = vmul.f32 %v584, %v586
        %v588 = vadd.f32 %v584, %v587
        %vm589 = vweird.f32 %v574
        %vm590 = vweird.f32 %v584
        %vm591 = vmor %vm589, %vm590
        %v592 = vsel %vm591, %v584, %v588
        %v593 = vand.u32 2147483647, %v574
        %vm594 = vcmp.eq.f32.partialorder %v593, 8.507059e+37
        %v595 = vand.u32 %v574, 2147483648
        %v596 = vor.u32 1.1754944e-38, %v595
        %v597 = vsel %vm594, %v596, %v592
        %v598 = vrcp.pop %v577
        %v599 = vmul.f32 %v577, %v598
        %v600 = vsub.f32 1.0, %v599
        %v601 = vmul.f32 %v598, %v600
        %v602 = vadd.f32 %v598, %v601
        %vm603 = vweird.f32 %v577
        %vm604 = vweird.f32 %v598
        %vm605 = vmor %vm603, %vm604
        %v606 = vsel %vm605, %v598, %v602
        %v607 = vand.u32 2147483647, %v577
        %vm608 = vcmp.eq.f32.partialorder %v607, 8.507059e+37
        %v609 = vand.u32 %v577, 2147483648
        %v610 = vor.u32 1.1754944e-38, %v609
        %v611 = vsel %vm608, %v610, %v606
        %v612 = vrcp.pop %v580
        %v613 = vmul.f32 %v580, %v612
        %v614 = vsub.f32 1.0, %v613
        %v615 = vmul.f32 %v612, %v614
        %v616 = vadd.f32 %v612, %v615
        %vm617 = vweird.f32 %v580
        %vm618 = vweird.f32 %v612
        %vm619 = vmor %vm617, %vm618
        %v620 = vsel %vm619, %v612, %v616
        %v621 = vand.u32 2147483647, %v580
        %vm622 = vcmp.eq.f32.partialorder %v621, 8.507059e+37
        %v623 = vand.u32 %v580, 2147483648
        %v624 = vor.u32 1.1754944e-38, %v623
        %v625 = vsel %vm622, %v624, %v620
        %v626 = vrcp.pop %v583
        %v627 = vmul.f32 %v583, %v626
        %v628 = vsub.f32 1.0, %v627
        %v629 = vmul.f32 %v626, %v628
        %v630 = vadd.f32 %v626, %v629
        %vm631 = vweird.f32 %v583
        %vm632 = vweird.f32 %v626
        %vm633 = vmor %vm631, %vm632
        %v634 = vsel %vm633, %v626, %v630
        %v635 = vand.u32 2147483647, %v583
        %vm636 = vcmp.eq.f32.partialorder %v635, 8.507059e+37
        %v637 = vand.u32 %v583, 2147483648
        %v638 = vor.u32 1.1754944e-38, %v637
        %v639 = vsel %vm636, %v638, %v634
        %v640 = vmul.f32 %v565, %v597
        %v641 = vmul.f32 %v567, %v611
        %v642 = vmul.f32 %v569, %v625
        %v643 = vmul.f32 %v571, %v639
        %v644 = vrot.slane %v640, 4
        %vm645 = vcmask 1047556
        %v646 = vsel %vm645, 0.0, %v644
        %v648 = vunpack.c.l.s4 1983009808
        %v649 = vunpack.c.0.s8 %v648
        %v650 = vperm.slane %v640, %v649
        %v652 = vunpack.c.l.s4 1983009808
        %v653 = vunpack.c.0.s8 %v652
        %v654 = vperm.slane %v646, %v653
        %v655 = vrot.slane %v641, 4
        %v656 = vsel %vm645, 0.0, %v655
        %v658 = vunpack.c.l.s4 1983009808
        %v659 = vunpack.c.0.s8 %v658
        %v660 = vperm.slane %v641, %v659
        %v662 = vunpack.c.l.s4 1983009808
        %v663 = vunpack.c.0.s8 %v662
        %v664 = vperm.slane %v656, %v663
        %v665 = vrot.slane %v660, 4
        %v666 = vsel %vm645, %v665, %v650
        %v667 = vrot.slane %v650, 4
        %v668 = vsel %vm645, %v660, %v667
        %v670 = vunpack.c.l.s4 1934713408
        %v671 = vunpack.c.0.s8 %v670
        %v672 = vperm.slane %v666, %v671
        %v674 = vunpack.c.l.s4 1934713408
        %v675 = vunpack.c.0.s8 %v674
        %v676 = vperm.slane %v668, %v675
        %v677 = vrot.slane %v664, 4
        %v678 = vsel %vm645, %v677, %v654
        %v679 = vrot.slane %v654, 4
        %v680 = vsel %vm645, %v664, %v679
        %v682 = vunpack.c.l.s4 1934713408
        %v683 = vunpack.c.0.s8 %v682
        %v684 = vperm.slane %v678, %v683
        %v686 = vunpack.c.l.s4 1934713408
        %v687 = vunpack.c.0.s8 %v686
        %v688 = vperm.slane %v680, %v687
        %v689 = vrot.slane %v672, 4
        %v690 = vsel %vm645, 0.0, %v689
        %v691 = vrot.slane %v676, 4
        %v692 = vsel %vm645, 0.0, %v691
        %v693 = vrot.slane %v684, 4
        %v694 = vsel %vm645, 0.0, %v693
        %v695 = vrot.slane %v688, 4
        %v696 = vsel %vm645, 0.0, %v695
        %v697 = vrot.slane %v642, 4
        %v698 = vsel %vm645, 0.0, %v697
        %v700 = vunpack.c.l.s4 1983009808
        %v701 = vunpack.c.0.s8 %v700
        %v702 = vperm.slane %v642, %v701
        %v704 = vunpack.c.l.s4 1983009808
        %v705 = vunpack.c.0.s8 %v704
        %v706 = vperm.slane %v698, %v705
        %v707 = vrot.slane %v643, 4
        %v708 = vsel %vm645, 0.0, %v707
        %v710 = vunpack.c.l.s4 1983009808
        %v711 = vunpack.c.0.s8 %v710
        %v712 = vperm.slane %v643, %v711
        %v714 = vunpack.c.l.s4 1983009808
        %v715 = vunpack.c.0.s8 %v714
        %v716 = vperm.slane %v708, %v715
        %v717 = vrot.slane %v712, 4
        %v718 = vsel %vm645, %v717, %v702
        %v719 = vrot.slane %v702, 4
        %v720 = vsel %vm645, %v712, %v719
        %v722 = vunpack.c.l.s4 1934713408
        %v723 = vunpack.c.0.s8 %v722
        %v724 = vperm.slane %v718, %v723
        %v726 = vunpack.c.l.s4 1934713408
        %v727 = vunpack.c.0.s8 %v726
        %v728 = vperm.slane %v720, %v727
        %v729 = vrot.slane %v716, 4
        %v730 = vsel %vm645, %v729, %v706
        %v731 = vrot.slane %v706, 4
        %v732 = vsel %vm645, %v716, %v731
        %v734 = vunpack.c.l.s4 1934713408
        %v735 = vunpack.c.0.s8 %v734
        %v736 = vperm.slane %v730, %v735
        %v738 = vunpack.c.l.s4 1934713408
        %v739 = vunpack.c.0.s8 %v738
        %v740 = vperm.slane %v732, %v739
        %v741 = vrot.slane %v724, 4
        %v742 = vsel %vm645, 0.0, %v741
        %v743 = vrot.slane %v728, 4
        %v744 = vsel %vm645, 0.0, %v743
        %v745 = vrot.slane %v736, 4
        %v746 = vsel %vm645, 0.0, %v745
        %v747 = vrot.slane %v740, 4
        %v748 = vsel %vm645, 0.0, %v747
        %751 = vrot.lane.b32.xlu0 %v690, 8
        %v752 = vpop.permute.xlu0 %751
        %753 = vrot.lane.b32.xlu0 %v742, 8
        %v754 = vpop.permute.xlu0 %753
        %759 = vrot.lane.b32.xlu0 %v676, 16
        %v760 = vpop.permute.xlu0 %759
        %761 = vrot.lane.b32.xlu0 %v728, 16
        %v762 = vpop.permute.xlu0 %761
        %767 = vrot.lane.b32.xlu0 %v692, 24
        %v768 = vpop.permute.xlu0 %767
        %769 = vrot.lane.b32.xlu0 %v744, 24
        %v770 = vpop.permute.xlu0 %769
        %775 = vrot.lane.b32.xlu0 %v684, 32
        %v776 = vpop.permute.xlu0 %775
        %777 = vrot.lane.b32.xlu0 %v736, 32
        %v778 = vpop.permute.xlu0 %777
        %783 = vrot.lane.b32.xlu0 %v694, 40
        %v784 = vpop.permute.xlu0 %783
        %785 = vrot.lane.b32.xlu0 %v746, 40
        %v786 = vpop.permute.xlu0 %785
        %791 = vrot.lane.b32.xlu0 %v688, 48
        %v792 = vpop.permute.xlu0 %791
        %793 = vrot.lane.b32.xlu0 %v740, 48
        %v794 = vpop.permute.xlu0 %793
        %799 = vrot.lane.b32.xlu0 %v696, 56
        %v800 = vpop.permute.xlu0 %799
        %801 = vrot.lane.b32.xlu0 %v748, 56
        %v802 = vpop.permute.xlu0 %801
        %v805 = vsel %vm443, %v672, %v752
        %v806 = vsel %vm443, %v724, %v754
        %vm807 = vcmask 130048
        %v808 = vsel %vm807, %v805, %v760
        %v809 = vsel %vm807, %v806, %v762
        %vm810 = vcmask 195584
        %v811 = vsel %vm810, %v808, %v768
        %v812 = vsel %vm810, %v809, %v770
        %v813 = vsel %vm334, %v811, %v776
        %v814 = vsel %vm334, %v812, %v778
        %vm815 = vcmask 326656
        %v816 = vsel %vm815, %v813, %v784
        %v817 = vsel %vm815, %v814, %v786
        %vm818 = vcmask 392192
        %v819 = vsel %vm818, %v816, %v792
        %v820 = vsel %vm818, %v817, %v794
        %vm821 = vcmask 457728
        %v822 = vsel %vm821, %v819, %v800
        %v823 = vsel %vm821, %v820, %v802
        %vm824 = vcmask 517120
        %825 = vst.msk [vmem:[%s312] sm:$0x3] %vm824, %v822
        %826 = vst.msk [vmem:[%s312 + $0x2] sm:$0x3] %vm824, %v823
        %v828 = vsel %vm443, %v640, 0
        %830 = vmatpush.msra.mxu0 0.0
        %831 = vmatpush.msra.mxu0 0.0
        %832 = vmatpush.msra.mxu0 0.0
        %833 = vmatpush.msra.mxu0 0.0
        %834 = vmatpush.msra.mxu0 0.0
        %835 = vmatpush.msra.mxu0 0.0
        %836 = vmatpush.msra.mxu0 0.0
        %837 = vmatpush.msra.mxu0 0.0
        %838 = vmatpush.msra.mxu0 0.0
        %839 = vmatpush.msra.mxu0 0.0
        %840 = vmatpush.msra.mxu0 0.0
        %841 = vmatpush.msra.mxu0 0.0
        %842 = vmatpush.msra.mxu0 0.0
        %843 = vmatpush.msra.mxu0 0.0
        %844 = vmatpush.msra.mxu0 0.0
        %845 = vmatpush.msra.mxu0 %v431
        %846 = vmatmul.f32.gmra.mxu0 %v828
        %v847 = vpop.f32.mrf.mxu0
        %v848 = vadd.f32 0.0, %v847
        %849 = vdwg.mxu0
        %v851 = vsel %vm443, %v641, 0
        %853 = vmatpush.msra.mxu0 0.0
        %854 = vmatpush.msra.mxu0 0.0
        %855 = vmatpush.msra.mxu0 0.0
        %856 = vmatpush.msra.mxu0 0.0
        %857 = vmatpush.msra.mxu0 0.0
        %858 = vmatpush.msra.mxu0 0.0
        %859 = vmatpush.msra.mxu0 0.0
        %860 = vmatpush.msra.mxu0 0.0
        %861 = vmatpush.msra.mxu0 0.0
        %862 = vmatpush.msra.mxu0 0.0
        %863 = vmatpush.msra.mxu0 0.0
        %864 = vmatpush.msra.mxu0 0.0
        %865 = vmatpush.msra.mxu0 0.0
        %866 = vmatpush.msra.mxu0 0.0
        %867 = vmatpush.msra.mxu0 0.0
        %868 = vmatpush.msra.mxu0 %v434
        %869 = vmatmul.f32.gmra.mxu0 %v851
        %v870 = vpop.f32.mrf.mxu0
        %v871 = vadd.f32 0.0, %v870
        %872 = vdwg.mxu0
        %v874 = vsel %vm443, %v642, 0
        %876 = vmatpush.msra.mxu0 0.0
        %877 = vmatpush.msra.mxu0 0.0
        %878 = vmatpush.msra.mxu0 0.0
        %879 = vmatpush.msra.mxu0 0.0
        %880 = vmatpush.msra.mxu0 0.0
        %881 = vmatpush.msra.mxu0 0.0
        %882 = vmatpush.msra.mxu0 0.0
        %883 = vmatpush.msra.mxu0 0.0
        %884 = vmatpush.msra.mxu0 0.0
        %885 = vmatpush.msra.mxu0 0.0
        %886 = vmatpush.msra.mxu0 0.0
        %887 = vmatpush.msra.mxu0 0.0
        %888 = vmatpush.msra.mxu0 0.0
        %889 = vmatpush.msra.mxu0 0.0
        %890 = vmatpush.msra.mxu0 0.0
        %891 = vmatpush.msra.mxu0 %v437
        %892 = vmatmul.f32.gmra.mxu0 %v874
        %v893 = vpop.f32.mrf.mxu0
        %v894 = vadd.f32 0.0, %v893
        %895 = vdwg.mxu0
        %v897 = vsel %vm443, %v643, 0
        %899 = vmatpush.msra.mxu0 0.0
        %900 = vmatpush.msra.mxu0 0.0
        %901 = vmatpush.msra.mxu0 0.0
        %902 = vmatpush.msra.mxu0 0.0
        %903 = vmatpush.msra.mxu0 0.0
        %904 = vmatpush.msra.mxu0 0.0
        %905 = vmatpush.msra.mxu0 0.0
        %906 = vmatpush.msra.mxu0 0.0
        %907 = vmatpush.msra.mxu0 0.0
        %908 = vmatpush.msra.mxu0 0.0
        %909 = vmatpush.msra.mxu0 0.0
        %910 = vmatpush.msra.mxu0 0.0
        %911 = vmatpush.msra.mxu0 0.0
        %912 = vmatpush.msra.mxu0 0.0
        %913 = vmatpush.msra.mxu0 0.0
        %914 = vmatpush.msra.mxu0 %v440
        %915 = vmatmul.f32.gmra.mxu0 %v897
        %v916 = vpop.f32.mrf.mxu0
        %v917 = vadd.f32 0.0, %v916
        %918 = vdwg.mxu0
        %919 = vrot.lane.b32.xlu0 %v365, 120
        %v920 = vpop.permute.xlu0 %919
        %921 = vrot.lane.b32.xlu0 %v398, 120
        %v922 = vpop.permute.xlu0 %921
        %v923 = vsel %vm443, %v920, 0
        %v925 = vsel %vm443, %v922, 0
        %927 = vmatpush.xpose.msra.mxu0 0.0
        %928 = vmatpush.xpose.msra.mxu0 0.0
        %929 = vmatpush.xpose.msra.mxu0 0.0
        %930 = vmatpush.xpose.msra.mxu0 0.0
        %931 = vmatpush.xpose.msra.mxu0 0.0
        %932 = vmatpush.xpose.msra.mxu0 0.0
        %933 = vmatpush.xpose.msra.mxu0 0.0
        %934 = vmatpush.xpose.msra.mxu0 0.0
        %935 = vmatpush.xpose.msra.mxu0 0.0
        %936 = vmatpush.xpose.msra.mxu0 0.0
        %937 = vmatpush.xpose.msra.mxu0 0.0
        %938 = vmatpush.xpose.msra.mxu0 0.0
        %939 = vmatpush.xpose.msra.mxu0 0.0
        %940 = vmatpush.xpose.msra.mxu0 0.0
        %941 = vmatpush.xpose.msra.mxu0 0.0
        %942 = vmatpush.xpose.msra.mxu0 %v925
        %943 = vmatmul.f32.gmra.mxu0 %v923
        %v944 = vpop.f32.mrf.mxu0
        %v945 = vadd.f32 %v442, %v944
        %946 = vdwg.mxu0
        %947 = vrot.lane.b32.xlu0 %v368, 120
        %v948 = vpop.permute.xlu0 %947
        %949 = vrot.lane.b32.xlu0 %v401, 120
        %v950 = vpop.permute.xlu0 %949
        %v951 = vsel %vm443, %v948, 0
        %v953 = vsel %vm443, %v950, 0
        %955 = vmatpush.xpose.msra.mxu0 0.0
        %956 = vmatpush.xpose.msra.mxu0 0.0
        %957 = vmatpush.xpose.msra.mxu0 0.0
        %958 = vmatpush.xpose.msra.mxu0 0.0
        %959 = vmatpush.xpose.msra.mxu0 0.0
        %960 = vmatpush.xpose.msra.mxu0 0.0
        %961 = vmatpush.xpose.msra.mxu0 0.0
        %962 = vmatpush.xpose.msra.mxu0 0.0
        %963 = vmatpush.xpose.msra.mxu0 0.0
        %964 = vmatpush.xpose.msra.mxu0 0.0
        %965 = vmatpush.xpose.msra.mxu0 0.0
        %966 = vmatpush.xpose.msra.mxu0 0.0
        %967 = vmatpush.xpose.msra.mxu0 0.0
        %968 = vmatpush.xpose.msra.mxu0 0.0
        %969 = vmatpush.xpose.msra.mxu0 0.0
        %970 = vmatpush.xpose.msra.mxu0 %v953
        %971 = vmatmul.f32.gmra.mxu0 %v951
        %v972 = vpop.f32.mrf.mxu0
        %v973 = vadd.f32 %v442, %v972
        %974 = vdwg.mxu0
        %975 = vrot.lane.b32.xlu0 %v371, 120
        %v976 = vpop.permute.xlu0 %975
        %977 = vrot.lane.b32.xlu0 %v404, 120
        %v978 = vpop.permute.xlu0 %977
        %v979 = vsel %vm443, %v976, 0
        %v981 = vsel %vm443, %v978, 0
        %983 = vmatpush.xpose.msra.mxu0 0.0
        %984 = vmatpush.xpose.msra.mxu0 0.0
        %985 = vmatpush.xpose.msra.mxu0 0.0
        %986 = vmatpush.xpose.msra.mxu0 0.0
        %987 = vmatpush.xpose.msra.mxu0 0.0
        %988 = vmatpush.xpose.msra.mxu0 0.0
        %989 = vmatpush.xpose.msra.mxu0 0.0
        %990 = vmatpush.xpose.msra.mxu0 0.0
        %991 = vmatpush.xpose.msra.mxu0 0.0
        %992 = vmatpush.xpose.msra.mxu0 0.0
        %993 = vmatpush.xpose.msra.mxu0 0.0
        %994 = vmatpush.xpose.msra.mxu0 0.0
        %995 = vmatpush.xpose.msra.mxu0 0.0
        %996 = vmatpush.xpose.msra.mxu0 0.0
        %997 = vmatpush.xpose.msra.mxu0 0.0
        %998 = vmatpush.xpose.msra.mxu0 %v981
        %999 = vmatmul.f32.gmra.mxu0 %v979
        %v1000 = vpop.f32.mrf.mxu0
        %v1001 = vadd.f32 %v442, %v1000
        %1002 = vdwg.mxu0
        %1003 = vrot.lane.b32.xlu0 %v374, 120
        %v1004 = vpop.permute.xlu0 %1003
        %1005 = vrot.lane.b32.xlu0 %v407, 120
        %v1006 = vpop.permute.xlu0 %1005
        %v1007 = vsel %vm443, %v1004, 0
        %v1009 = vsel %vm443, %v1006, 0
        %1011 = vmatpush.xpose.msra.mxu0 0.0
        %1012 = vmatpush.xpose.msra.mxu0 0.0
        %1013 = vmatpush.xpose.msra.mxu0 0.0
        %1014 = vmatpush.xpose.msra.mxu0 0.0
        %1015 = vmatpush.xpose.msra.mxu0 0.0
        %1016 = vmatpush.xpose.msra.mxu0 0.0
        %1017 = vmatpush.xpose.msra.mxu0 0.0
        %1018 = vmatpush.xpose.msra.mxu0 0.0
        %1019 = vmatpush.xpose.msra.mxu0 0.0
        %1020 = vmatpush.xpose.msra.mxu0 0.0
        %1021 = vmatpush.xpose.msra.mxu0 0.0
        %1022 = vmatpush.xpose.msra.mxu0 0.0
        %1023 = vmatpush.xpose.msra.mxu0 0.0
        %1024 = vmatpush.xpose.msra.mxu0 0.0
        %1025 = vmatpush.xpose.msra.mxu0 0.0
        %1026 = vmatpush.xpose.msra.mxu0 %v1009
        %1027 = vmatmul.f32.gmra.mxu0 %v1007
        %v1028 = vpop.f32.mrf.mxu0
        %v1029 = vadd.f32 %v442, %v1028
        %1030 = vdwg.mxu0
        %v1031 = vsel %vm443, %v945, -inf
        %1032 = vmax.xlane.f32.xlu0 %v1031
        %v1033 = vpop.xlane.xlu0 %1032
        %v1034 = vsel %vm443, %v973, -inf
        %1035 = vmax.xlane.f32.xlu0 %v1034
        %v1036 = vpop.xlane.xlu0 %1035
        %v1037 = vsel %vm443, %v1001, -inf
        %1038 = vmax.xlane.f32.xlu0 %v1037
        %v1039 = vpop.xlane.xlu0 %1038
        %v1040 = vsel %vm443, %v1029, -inf
        %1041 = vmax.xlane.f32.xlu0 %v1040
        %v1042 = vpop.xlane.xlu0 %1041
        %v1043 = vsub.f32 %v945, %v1033
        %v1044 = vsub.f32 %v973, %v1036
        %v1045 = vsub.f32 %v1001, %v1039
        %v1046 = vsub.f32 %v1029, %v1042
        %v1047 = vmul.f32 %v1043, 1.442695
        %v1048 = vpow.pop %v1047
        %v1049 = vmul.f32 %v1044, 1.442695
        %v1050 = vpow.pop %v1049
        %v1051 = vmul.f32 %v1045, 1.442695
        %v1052 = vpow.pop %v1051
        %v1053 = vmul.f32 %v1046, 1.442695
        %v1054 = vpow.pop %v1053
        %v1055 = vsel %vm443, %v1048, 0.0
        %1056 = vadd.xlane.f32.xlu0 %v1055
        %v1057 = vpop.xlane.xlu0 %1056
        %v1058 = vsel %vm443, %v1050, 0.0
        %1059 = vadd.xlane.f32.xlu0 %v1058
        %v1060 = vpop.xlane.xlu0 %1059
        %v1061 = vsel %vm443, %v1052, 0.0
        %1062 = vadd.xlane.f32.xlu0 %v1061
        %v1063 = vpop.xlane.xlu0 %1062
        %v1064 = vsel %vm443, %v1054, 0.0
        %1065 = vadd.xlane.f32.xlu0 %v1064
        %v1066 = vpop.xlane.xlu0 %1065
        %v1067 = vrcp.pop %v1057
        %v1068 = vmul.f32 %v1057, %v1067
        %v1069 = vsub.f32 1.0, %v1068
        %v1070 = vmul.f32 %v1067, %v1069
        %v1071 = vadd.f32 %v1067, %v1070
        %vm1072 = vweird.f32 %v1057
        %vm1073 = vweird.f32 %v1067
        %vm1074 = vmor %vm1072, %vm1073
        %v1075 = vsel %vm1074, %v1067, %v1071
        %v1076 = vand.u32 2147483647, %v1057
        %vm1077 = vcmp.eq.f32.partialorder %v1076, 8.507059e+37
        %v1078 = vand.u32 %v1057, 2147483648
        %v1079 = vor.u32 1.1754944e-38, %v1078
        %v1080 = vsel %vm1077, %v1079, %v1075
        %v1081 = vrcp.pop %v1060
        %v1082 = vmul.f32 %v1060, %v1081
        %v1083 = vsub.f32 1.0, %v1082
        %v1084 = vmul.f32 %v1081, %v1083
        %v1085 = vadd.f32 %v1081, %v1084
        %vm1086 = vweird.f32 %v1060
        %vm1087 = vweird.f32 %v1081
        %vm1088 = vmor %vm1086, %vm1087
        %v1089 = vsel %vm1088, %v1081, %v1085
        %v1090 = vand.u32 2147483647, %v1060
        %vm1091 = vcmp.eq.f32.partialorder %v1090, 8.507059e+37
        %v1092 = vand.u32 %v1060, 2147483648
        %v1093 = vor.u32 1.1754944e-38, %v1092
        %v1094 = vsel %vm1091, %v1093, %v1089
        %v1095 = vrcp.pop %v1063
        %v1096 = vmul.f32 %v1063, %v1095
        %v1097 = vsub.f32 1.0, %v1096
        %v1098 = vmul.f32 %v1095, %v1097
        %v1099 = vadd.f32 %v1095, %v1098
        %vm1100 = vweird.f32 %v1063
        %vm1101 = vweird.f32 %v1095
        %vm1102 = vmor %vm1100, %vm1101
        %v1103 = vsel %vm1102, %v1095, %v1099
        %v1104 = vand.u32 2147483647, %v1063
        %vm1105 = vcmp.eq.f32.partialorder %v1104, 8.507059e+37
        %v1106 = vand.u32 %v1063, 2147483648
        %v1107 = vor.u32 1.1754944e-38, %v1106
        %v1108 = vsel %vm1105, %v1107, %v1103
        %v1109 = vrcp.pop %v1066
        %v1110 = vmul.f32 %v1066, %v1109
        %v1111 = vsub.f32 1.0, %v1110
        %v1112 = vmul.f32 %v1109, %v1111
        %v1113 = vadd.f32 %v1109, %v1112
        %vm1114 = vweird.f32 %v1066
        %vm1115 = vweird.f32 %v1109
        %vm1116 = vmor %vm1114, %vm1115
        %v1117 = vsel %vm1116, %v1109, %v1113
        %v1118 = vand.u32 2147483647, %v1066
        %vm1119 = vcmp.eq.f32.partialorder %v1118, 8.507059e+37
        %v1120 = vand.u32 %v1066, 2147483648
        %v1121 = vor.u32 1.1754944e-38, %v1120
        %v1122 = vsel %vm1119, %v1121, %v1117
        %v1123 = vmul.f32 %v1048, %v1080
        %v1124 = vmul.f32 %v1050, %v1094
        %v1125 = vmul.f32 %v1052, %v1108
        %v1126 = vmul.f32 %v1054, %v1122
        %v1127 = vrot.slane %v1123, 4
        %v1128 = vsel %vm645, 0.0, %v1127
        %v1130 = vunpack.c.l.s4 1983009808
        %v1131 = vunpack.c.0.s8 %v1130
        %v1132 = vperm.slane %v1123, %v1131
        %v1134 = vunpack.c.l.s4 1983009808
        %v1135 = vunpack.c.0.s8 %v1134
        %v1136 = vperm.slane %v1128, %v1135
        %v1137 = vrot.slane %v1124, 4
        %v1138 = vsel %vm645, 0.0, %v1137
        %v1140 = vunpack.c.l.s4 1983009808
        %v1141 = vunpack.c.0.s8 %v1140
        %v1142 = vperm.slane %v1124, %v1141
        %v1144 = vunpack.c.l.s4 1983009808
        %v1145 = vunpack.c.0.s8 %v1144
        %v1146 = vperm.slane %v1138, %v1145
        %v1147 = vrot.slane %v1142, 4
        %v1148 = vsel %vm645, %v1147, %v1132
        %v1149 = vrot.slane %v1132, 4
        %v1150 = vsel %vm645, %v1142, %v1149
        %v1152 = vunpack.c.l.s4 1934713408
        %v1153 = vunpack.c.0.s8 %v1152
        %v1154 = vperm.slane %v1148, %v1153
        %v1156 = vunpack.c.l.s4 1934713408
        %v1157 = vunpack.c.0.s8 %v1156
        %v1158 = vperm.slane %v1150, %v1157
        %v1159 = vrot.slane %v1146, 4
        %v1160 = vsel %vm645, %v1159, %v1136
        %v1161 = vrot.slane %v1136, 4
        %v1162 = vsel %vm645, %v1146, %v1161
        %v1164 = vunpack.c.l.s4 1934713408
        %v1165 = vunpack.c.0.s8 %v1164
        %v1166 = vperm.slane %v1160, %v1165
        %v1168 = vunpack.c.l.s4 1934713408
        %v1169 = vunpack.c.0.s8 %v1168
        %v1170 = vperm.slane %v1162, %v1169
        %v1171 = vrot.slane %v1154, 4
        %v1172 = vsel %vm645, 0.0, %v1171
        %v1173 = vrot.slane %v1158, 4
        %v1174 = vsel %vm645, 0.0, %v1173
        %v1175 = vrot.slane %v1166, 4
        %v1176 = vsel %vm645, 0.0, %v1175
        %v1177 = vrot.slane %v1170, 4
        %v1178 = vsel %vm645, 0.0, %v1177
        %v1179 = vrot.slane %v1125, 4
        %v1180 = vsel %vm645, 0.0, %v1179
        %v1182 = vunpack.c.l.s4 1983009808
        %v1183 = vunpack.c.0.s8 %v1182
        %v1184 = vperm.slane %v1125, %v1183
        %v1186 = vunpack.c.l.s4 1983009808
        %v1187 = vunpack.c.0.s8 %v1186
        %v1188 = vperm.slane %v1180, %v1187
        %v1189 = vrot.slane %v1126, 4
        %v1190 = vsel %vm645, 0.0, %v1189
        %v1192 = vunpack.c.l.s4 1983009808
        %v1193 = vunpack.c.0.s8 %v1192
        %v1194 = vperm.slane %v1126, %v1193
        %v1196 = vunpack.c.l.s4 1983009808
        %v1197 = vunpack.c.0.s8 %v1196
        %v1198 = vperm.slane %v1190, %v1197
        %v1199 = vrot.slane %v1194, 4
        %v1200 = vsel %vm645, %v1199, %v1184
        %v1201 = vrot.slane %v1184, 4
        %v1202 = vsel %vm645, %v1194, %v1201
        %v1204 = vunpack.c.l.s4 1934713408
        %v1205 = vunpack.c.0.s8 %v1204
        %v1206 = vperm.slane %v1200, %v1205
        %v1208 = vunpack.c.l.s4 1934713408
        %v1209 = vunpack.c.0.s8 %v1208
        %v1210 = vperm.slane %v1202, %v1209
        %v1211 = vrot.slane %v1198, 4
        %v1212 = vsel %vm645, %v1211, %v1188
        %v1213 = vrot.slane %v1188, 4
        %v1214 = vsel %vm645, %v1198, %v1213
        %v1216 = vunpack.c.l.s4 1934713408
        %v1217 = vunpack.c.0.s8 %v1216
        %v1218 = vperm.slane %v1212, %v1217
        %v1220 = vunpack.c.l.s4 1934713408
        %v1221 = vunpack.c.0.s8 %v1220
        %v1222 = vperm.slane %v1214, %v1221
        %v1223 = vrot.slane %v1206, 4
        %v1224 = vsel %vm645, 0.0, %v1223
        %v1225 = vrot.slane %v1210, 4
        %v1226 = vsel %vm645, 0.0, %v1225
        %v1227 = vrot.slane %v1218, 4
        %v1228 = vsel %vm645, 0.0, %v1227
        %v1229 = vrot.slane %v1222, 4
        %v1230 = vsel %vm645, 0.0, %v1229
        %1233 = vrot.lane.b32.xlu0 %v1172, 8
        %v1234 = vpop.permute.xlu0 %1233
        %1235 = vrot.lane.b32.xlu0 %v1224, 8
        %v1236 = vpop.permute.xlu0 %1235
        %1241 = vrot.lane.b32.xlu0 %v1158, 16
        %v1242 = vpop.permute.xlu0 %1241
        %1243 = vrot.lane.b32.xlu0 %v1210, 16
        %v1244 = vpop.permute.xlu0 %1243
        %1249 = vrot.lane.b32.xlu0 %v1174, 24
        %v1250 = vpop.permute.xlu0 %1249
        %1251 = vrot.lane.b32.xlu0 %v1226, 24
        %v1252 = vpop.permute.xlu0 %1251
        %1257 = vrot.lane.b32.xlu0 %v1166, 32
        %v1258 = vpop.permute.xlu0 %1257
        %1259 = vrot.lane.b32.xlu0 %v1218, 32
        %v1260 = vpop.permute.xlu0 %1259
        %1265 = vrot.lane.b32.xlu0 %v1176, 40
        %v1266 = vpop.permute.xlu0 %1265
        %1267 = vrot.lane.b32.xlu0 %v1228, 40
        %v1268 = vpop.permute.xlu0 %1267
        %1273 = vrot.lane.b32.xlu0 %v1170, 48
        %v1274 = vpop.permute.xlu0 %1273
        %1275 = vrot.lane.b32.xlu0 %v1222, 48
        %v1276 = vpop.permute.xlu0 %1275
        %1281 = vrot.lane.b32.xlu0 %v1178, 56
        %v1282 = vpop.permute.xlu0 %1281
        %1283 = vrot.lane.b32.xlu0 %v1230, 56
        %v1284 = vpop.permute.xlu0 %1283
        %v1287 = vsel %vm443, %v1154, %v1234
        %v1288 = vsel %vm443, %v1206, %v1236
        %v1289 = vsel %vm807, %v1287, %v1242
        %v1290 = vsel %vm807, %v1288, %v1244
        %v1291 = vsel %vm810, %v1289, %v1250
        %v1292 = vsel %vm810, %v1290, %v1252
        %v1293 = vsel %vm334, %v1291, %v1258
        %v1294 = vsel %vm334, %v1292, %v1260
        %v1295 = vsel %vm815, %v1293, %v1266
        %v1296 = vsel %vm815, %v1294, %v1268
        %v1297 = vsel %vm818, %v1295, %v1274
        %v1298 = vsel %vm818, %v1296, %v1276
        %v1299 = vsel %vm821, %v1297, %v1282
        %v1300 = vsel %vm821, %v1298, %v1284
        %s1301 = scalar_lea.vmem %s312, 4 [#allocation7]
        %1302 = vst.msk [vmem:[%s1301] sm:$0x3] %vm824, %v1299
        %1303 = vst.msk [vmem:[%s1301 + $0x2] sm:$0x3] %vm824, %v1300
        %1305 = vrot.lane.b32.xlu0 %v431, 120
        %v1306 = vpop.permute.xlu0 %1305
        %v1309 = vsel %vm443, %v1123, 0
        %1311 = vmatpush.msra.mxu0 0.0
        %1312 = vmatpush.msra.mxu0 0.0
        %1313 = vmatpush.msra.mxu0 0.0
        %1314 = vmatpush.msra.mxu0 0.0
        %1315 = vmatpush.msra.mxu0 0.0
        %1316 = vmatpush.msra.mxu0 0.0
        %1317 = vmatpush.msra.mxu0 0.0
        %1318 = vmatpush.msra.mxu0 0.0
        %1319 = vmatpush.msra.mxu0 0.0
        %1320 = vmatpush.msra.mxu0 0.0
        %1321 = vmatpush.msra.mxu0 0.0
        %1322 = vmatpush.msra.mxu0 0.0
        %1323 = vmatpush.msra.mxu0 0.0
        %1324 = vmatpush.msra.mxu0 0.0
        %1325 = vmatpush.msra.mxu0 0.0
        %1326 = vmatpush.msra.mxu0 %v1306
        %1327 = vmatmul.f32.gmra.mxu0 %v1309
        %v1328 = vpop.f32.mrf.mxu0
        %v1329 = vadd.f32 0.0, %v1328
        %1330 = vdwg.mxu0
        %1332 = vrot.lane.b32.xlu0 %v434, 120
        %v1333 = vpop.permute.xlu0 %1332
        %v1336 = vsel %vm443, %v1124, 0
        %1338 = vmatpush.msra.mxu0 0.0
        %1339 = vmatpush.msra.mxu0 0.0
        %1340 = vmatpush.msra.mxu0 0.0
        %1341 = vmatpush.msra.mxu0 0.0
        %1342 = vmatpush.msra.mxu0 0.0
        %1343 = vmatpush.msra.mxu0 0.0
        %1344 = vmatpush.msra.mxu0 0.0
        %1345 = vmatpush.msra.mxu0 0.0
        %1346 = vmatpush.msra.mxu0 0.0
        %1347 = vmatpush.msra.mxu0 0.0
        %1348 = vmatpush.msra.mxu0 0.0
        %1349 = vmatpush.msra.mxu0 0.0
        %1350 = vmatpush.msra.mxu0 0.0
        %1351 = vmatpush.msra.mxu0 0.0
        %1352 = vmatpush.msra.mxu0 0.0
        %1353 = vmatpush.msra.mxu0 %v1333
        %1354 = vmatmul.f32.gmra.mxu0 %v1336
        %v1355 = vpop.f32.mrf.mxu0
        %v1356 = vadd.f32 0.0, %v1355
        %1357 = vdwg.mxu0
        %1359 = vrot.lane.b32.xlu0 %v437, 120
        %v1360 = vpop.permute.xlu0 %1359
        %v1363 = vsel %vm443, %v1125, 0
        %1365 = vmatpush.msra.mxu0 0.0
        %1366 = vmatpush.msra.mxu0 0.0
        %1367 = vmatpush.msra.mxu0 0.0
        %1368 = vmatpush.msra.mxu0 0.0
        %1369 = vmatpush.msra.mxu0 0.0
        %1370 = vmatpush.msra.mxu0 0.0
        %1371 = vmatpush.msra.mxu0 0.0
        %1372 = vmatpush.msra.mxu0 0.0
        %1373 = vmatpush.msra.mxu0 0.0
        %1374 = vmatpush.msra.mxu0 0.0
        %1375 = vmatpush.msra.mxu0 0.0
        %1376 = vmatpush.msra.mxu0 0.0
        %1377 = vmatpush.msra.mxu0 0.0
        %1378 = vmatpush.msra.mxu0 0.0
        %1379 = vmatpush.msra.mxu0 0.0
        %1380 = vmatpush.msra.mxu0 %v1360
        %1381 = vmatmul.f32.gmra.mxu0 %v1363
        %v1382 = vpop.f32.mrf.mxu0
        %v1383 = vadd.f32 0.0, %v1382
        %1384 = vdwg.mxu0
        %1386 = vrot.lane.b32.xlu0 %v440, 120
        %v1387 = vpop.permute.xlu0 %1386
        %v1390 = vsel %vm443, %v1126, 0
        %1392 = vmatpush.msra.mxu0 0.0
        %1393 = vmatpush.msra.mxu0 0.0
        %1394 = vmatpush.msra.mxu0 0.0
        %1395 = vmatpush.msra.mxu0 0.0
        %1396 = vmatpush.msra.mxu0 0.0
        %1397 = vmatpush.msra.mxu0 0.0
        %1398 = vmatpush.msra.mxu0 0.0
        %1399 = vmatpush.msra.mxu0 0.0
        %1400 = vmatpush.msra.mxu0 0.0
        %1401 = vmatpush.msra.mxu0 0.0
        %1402 = vmatpush.msra.mxu0 0.0
        %1403 = vmatpush.msra.mxu0 0.0
        %1404 = vmatpush.msra.mxu0 0.0
        %1405 = vmatpush.msra.mxu0 0.0
        %1406 = vmatpush.msra.mxu0 0.0
        %1407 = vmatpush.msra.mxu0 %v1387
        %1408 = vmatmul.f32.gmra.mxu0 %v1390
        %v1409 = vpop.f32.mrf.mxu0
        %v1410 = vadd.f32 0.0, %v1409
        %1411 = vdwg.mxu0
        %1412 = vrot.lane.b32.xlu0 %v365, 112
        %v1413 = vpop.permute.xlu0 %1412
        %1414 = vrot.lane.b32.xlu0 %v398, 112
        %v1415 = vpop.permute.xlu0 %1414
        %v1416 = vsel %vm443, %v1413, 0
        %v1418 = vsel %vm443, %v1415, 0
        %1420 = vmatpush.xpose.msra.mxu0 0.0
        %1421 = vmatpush.xpose.msra.mxu0 0.0
        %1422 = vmatpush.xpose.msra.mxu0 0.0
        %1423 = vmatpush.xpose.msra.mxu0 0.0
        %1424 = vmatpush.xpose.msra.mxu0 0.0
        %1425 = vmatpush.xpose.msra.mxu0 0.0
        %1426 = vmatpush.xpose.msra.mxu0 0.0
        %1427 = vmatpush.xpose.msra.mxu0 0.0
        %1428 = vmatpush.xpose.msra.mxu0 0.0
        %1429 = vmatpush.xpose.msra.mxu0 0.0
        %1430 = vmatpush.xpose.msra.mxu0 0.0
        %1431 = vmatpush.xpose.msra.mxu0 0.0
        %1432 = vmatpush.xpose.msra.mxu0 0.0
        %1433 = vmatpush.xpose.msra.mxu0 0.0
        %1434 = vmatpush.xpose.msra.mxu0 0.0
        %1435 = vmatpush.xpose.msra.mxu0 %v1418
        %1436 = vmatmul.f32.gmra.mxu0 %v1416
        %v1437 = vpop.f32.mrf.mxu0
        %v1438 = vadd.f32 %v442, %v1437
        %1439 = vdwg.mxu0
        %1440 = vrot.lane.b32.xlu0 %v368, 112
        %v1441 = vpop.permute.xlu0 %1440
        %1442 = vrot.lane.b32.xlu0 %v401, 112
        %v1443 = vpop.permute.xlu0 %1442
        %v1444 = vsel %vm443, %v1441, 0
        %v1446 = vsel %vm443, %v1443, 0
        %1448 = vmatpush.xpose.msra.mxu0 0.0
        %1449 = vmatpush.xpose.msra.mxu0 0.0
        %1450 = vmatpush.xpose.msra.mxu0 0.0
        %1451 = vmatpush.xpose.msra.mxu0 0.0
        %1452 = vmatpush.xpose.msra.mxu0 0.0
        %1453 = vmatpush.xpose.msra.mxu0 0.0
        %1454 = vmatpush.xpose.msra.mxu0 0.0
        %1455 = vmatpush.xpose.msra.mxu0 0.0
        %1456 = vmatpush.xpose.msra.mxu0 0.0
        %1457 = vmatpush.xpose.msra.mxu0 0.0
        %1458 = vmatpush.xpose.msra.mxu0 0.0
        %1459 = vmatpush.xpose.msra.mxu0 0.0
        %1460 = vmatpush.xpose.msra.mxu0 0.0
        %1461 = vmatpush.xpose.msra.mxu0 0.0
        %1462 = vmatpush.xpose.msra.mxu0 0.0
        %1463 = vmatpush.xpose.msra.mxu0 %v1446
        %1464 = vmatmul.f32.gmra.mxu0 %v1444
        %v1465 = vpop.f32.mrf.mxu0
        %v1466 = vadd.f32 %v442, %v1465
        %1467 = vdwg.mxu0
        %1468 = vrot.lane.b32.xlu0 %v371, 112
        %v1469 = vpop.permute.xlu0 %1468
        %1470 = vrot.lane.b32.xlu0 %v404, 112
        %v1471 = vpop.permute.xlu0 %1470
        %v1472 = vsel %vm443, %v1469, 0
        %v1474 = vsel %vm443, %v1471, 0
        %1476 = vmatpush.xpose.msra.mxu0 0.0
        %1477 = vmatpush.xpose.msra.mxu0 0.0
        %1478 = vmatpush.xpose.msra.mxu0 0.0
        %1479 = vmatpush.xpose.msra.mxu0 0.0
        %1480 = vmatpush.xpose.msra.mxu0 0.0
        %1481 = vmatpush.xpose.msra.mxu0 0.0
        %1482 = vmatpush.xpose.msra.mxu0 0.0
        %1483 = vmatpush.xpose.msra.mxu0 0.0
        %1484 = vmatpush.xpose.msra.mxu0 0.0
        %1485 = vmatpush.xpose.msra.mxu0 0.0
        %1486 = vmatpush.xpose.msra.mxu0 0.0
        %1487 = vmatpush.xpose.msra.mxu0 0.0
        %1488 = vmatpush.xpose.msra.mxu0 0.0
        %1489 = vmatpush.xpose.msra.mxu0 0.0
        %1490 = vmatpush.xpose.msra.mxu0 0.0
        %1491 = vmatpush.xpose.msra.mxu0 %v1474
        %1492 = vmatmul.f32.gmra.mxu0 %v1472
        %v1493 = vpop.f32.mrf.mxu0
        %v1494 = vadd.f32 %v442, %v1493
        %1495 = vdwg.mxu0
        %1496 = vrot.lane.b32.xlu0 %v374, 112
        %v1497 = vpop.permute.xlu0 %1496
        %1498 = vrot.lane.b32.xlu0 %v407, 112
        %v1499 = vpop.permute.xlu0 %1498
        %v1500 = vsel %vm443, %v1497, 0
        %v1502 = vsel %vm443, %v1499, 0
        %1504 = vmatpush.xpose.msra.mxu0 0.0
        %1505 = vmatpush.xpose.msra.mxu0 0.0
        %1506 = vmatpush.xpose.msra.mxu0 0.0
        %1507 = vmatpush.xpose.msra.mxu0 0.0
        %1508 = vmatpush.xpose.msra.mxu0 0.0
        %1509 = vmatpush.xpose.msra.mxu0 0.0
        %1510 = vmatpush.xpose.msra.mxu0 0.0
        %1511 = vmatpush.xpose.msra.mxu0 0.0
        %1512 = vmatpush.xpose.msra.mxu0 0.0
        %1513 = vmatpush.xpose.msra.mxu0 0.0
        %1514 = vmatpush.xpose.msra.mxu0 0.0
        %1515 = vmatpush.xpose.msra.mxu0 0.0
        %1516 = vmatpush.xpose.msra.mxu0 0.0
        %1517 = vmatpush.xpose.msra.mxu0 0.0
        %1518 = vmatpush.xpose.msra.mxu0 0.0
        %1519 = vmatpush.xpose.msra.mxu0 %v1502
        %1520 = vmatmul.f32.gmra.mxu0 %v1500
        %v1521 = vpop.f32.mrf.mxu0
        %v1522 = vadd.f32 %v442, %v1521
        %1523 = vdwg.mxu0
        %v1524 = vsel %vm443, %v1438, -inf
        %1525 = vmax.xlane.f32.xlu0 %v1524
        %v1526 = vpop.xlane.xlu0 %1525
        %v1527 = vsel %vm443, %v1466, -inf
        %1528 = vmax.xlane.f32.xlu0 %v1527
        %v1529 = vpop.xlane.xlu0 %1528
        %v1530 = vsel %vm443, %v1494, -inf
        %1531 = vmax.xlane.f32.xlu0 %v1530
        %v1532 = vpop.xlane.xlu0 %1531
        %v1533 = vsel %vm443, %v1522, -inf
        %1534 = vmax.xlane.f32.xlu0 %v1533
        %v1535 = vpop.xlane.xlu0 %1534
        %v1536 = vsub.f32 %v1438, %v1526
        %v1537 = vsub.f32 %v1466, %v1529
        %v1538 = vsub.f32 %v1494, %v1532
        %v1539 = vsub.f32 %v1522, %v1535
        %v1540 = vmul.f32 %v1536, 1.442695
        %v1541 = vpow.pop %v1540
        %v1542 = vmul.f32 %v1537, 1.442695
        %v1543 = vpow.pop %v1542
        %v1544 = vmul.f32 %v1538, 1.442695
        %v1545 = vpow.pop %v1544
        %v1546 = vmul.f32 %v1539, 1.442695
        %v1547 = vpow.pop %v1546
        %v1548 = vsel %vm443, %v1541, 0.0
        %1549 = vadd.xlane.f32.xlu0 %v1548
        %v1550 = vpop.xlane.xlu0 %1549
        %v1551 = vsel %vm443, %v1543, 0.0
        %1552 = vadd.xlane.f32.xlu0 %v1551
        %v1553 = vpop.xlane.xlu0 %1552
        %v1554 = vsel %vm443, %v1545, 0.0
        %1555 = vadd.xlane.f32.xlu0 %v1554
        %v1556 = vpop.xlane.xlu0 %1555
        %v1557 = vsel %vm443, %v1547, 0.0
        %1558 = vadd.xlane.f32.xlu0 %v1557
        %v1559 = vpop.xlane.xlu0 %1558
        %v1560 = vrcp.pop %v1550
        %v1561 = vmul.f32 %v1550, %v1560
        %v1562 = vsub.f32 1.0, %v1561
        %v1563 = vmul.f32 %v1560, %v1562
        %v1564 = vadd.f32 %v1560, %v1563
        %vm1565 = vweird.f32 %v1550
        %vm1566 = vweird.f32 %v1560
        %vm1567 = vmor %vm1565, %vm1566
        %v1568 = vsel %vm1567, %v1560, %v1564
        %v1569 = vand.u32 2147483647, %v1550
        %vm1570 = vcmp.eq.f32.partialorder %v1569, 8.507059e+37
        %v1571 = vand.u32 %v1550, 2147483648
        %v1572 = vor.u32 1.1754944e-38, %v1571
        %v1573 = vsel %vm1570, %v1572, %v1568
        %v1574 = vrcp.pop %v1553
        %v1575 = vmul.f32 %v1553, %v1574
        %v1576 = vsub.f32 1.0, %v1575
        %v1577 = vmul.f32 %v1574, %v1576
        %v1578 = vadd.f32 %v1574, %v1577
        %vm1579 = vweird.f32 %v1553
        %vm1580 = vweird.f32 %v1574
        %vm1581 = vmor %vm1579, %vm1580
        %v1582 = vsel %vm1581, %v1574, %v1578
        %v1583 = vand.u32 2147483647, %v1553
        %vm1584 = vcmp.eq.f32.partialorder %v1583, 8.507059e+37
        %v1585 = vand.u32 %v1553, 2147483648
        %v1586 = vor.u32 1.1754944e-38, %v1585
        %v1587 = vsel %vm1584, %v1586, %v1582
        %v1588 = vrcp.pop %v1556
        %v1589 = vmul.f32 %v1556, %v1588
        %v1590 = vsub.f32 1.0, %v1589
        %v1591 = vmul.f32 %v1588, %v1590
        %v1592 = vadd.f32 %v1588, %v1591
        %vm1593 = vweird.f32 %v1556
        %vm1594 = vweird.f32 %v1588
        %vm1595 = vmor %vm1593, %vm1594
        %v1596 = vsel %vm1595, %v1588, %v1592
        %v1597 = vand.u32 2147483647, %v1556
        %vm1598 = vcmp.eq.f32.partialorder %v1597, 8.507059e+37
        %v1599 = vand.u32 %v1556, 2147483648
        %v1600 = vor.u32 1.1754944e-38, %v1599
        %v1601 = vsel %vm1598, %v1600, %v1596
        %v1602 = vrcp.pop %v1559
        %v1603 = vmul.f32 %v1559, %v1602
        %v1604 = vsub.f32 1.0, %v1603
        %v1605 = vmul.f32 %v1602, %v1604
        %v1606 = vadd.f32 %v1602, %v1605
        %vm1607 = vweird.f32 %v1559
        %vm1608 = vweird.f32 %v1602
        %vm1609 = vmor %vm1607, %vm1608
        %v1610 = vsel %vm1609, %v1602, %v1606
        %v1611 = vand.u32 2147483647, %v1559
        %vm1612 = vcmp.eq.f32.partialorder %v1611, 8.507059e+37
        %v1613 = vand.u32 %v1559, 2147483648
        %v1614 = vor.u32 1.1754944e-38, %v1613
        %v1615 = vsel %vm1612, %v1614, %v1610
        %v1616 = vmul.f32 %v1541, %v1573
        %v1617 = vmul.f32 %v1543, %v1587
        %v1618 = vmul.f32 %v1545, %v1601
        %v1619 = vmul.f32 %v1547, %v1615
        %v1620 = vrot.slane %v1616, 4
        %v1621 = vsel %vm645, 0.0, %v1620
        %v1623 = vunpack.c.l.s4 1983009808
        %v1624 = vunpack.c.0.s8 %v1623
        %v1625 = vperm.slane %v1616, %v1624
        %v1627 = vunpack.c.l.s4 1983009808
        %v1628 = vunpack.c.0.s8 %v1627
        %v1629 = vperm.slane %v1621, %v1628
        %v1630 = vrot.slane %v1617, 4
        %v1631 = vsel %vm645, 0.0, %v1630
        %v1633 = vunpack.c.l.s4 1983009808
        %v1634 = vunpack.c.0.s8 %v1633
        %v1635 = vperm.slane %v1617, %v1634
        %v1637 = vunpack.c.l.s4 1983009808
        %v1638 = vunpack.c.0.s8 %v1637
        %v1639 = vperm.slane %v1631, %v1638
        %v1640 = vrot.slane %v1635, 4
        %v1641 = vsel %vm645, %v1640, %v1625
        %v1642 = vrot.slane %v1625, 4
        %v1643 = vsel %vm645, %v1635, %v1642
        %v1645 = vunpack.c.l.s4 1934713408
        %v1646 = vunpack.c.0.s8 %v1645
        %v1647 = vperm.slane %v1641, %v1646
        %v1649 = vunpack.c.l.s4 1934713408
        %v1650 = vunpack.c.0.s8 %v1649
        %v1651 = vperm.slane %v1643, %v1650
        %v1652 = vrot.slane %v1639, 4
        %v1653 = vsel %vm645, %v1652, %v1629
        %v1654 = vrot.slane %v1629, 4
        %v1655 = vsel %vm645, %v1639, %v1654
        %v1657 = vunpack.c.l.s4 1934713408
        %v1658 = vunpack.c.0.s8 %v1657
        %v1659 = vperm.slane %v1653, %v1658
        %v1661 = vunpack.c.l.s4 1934713408
        %v1662 = vunpack.c.0.s8 %v1661
        %v1663 = vperm.slane %v1655, %v1662
        %v1664 = vrot.slane %v1647, 4
        %v1665 = vsel %vm645, 0.0, %v1664
        %v1666 = vrot.slane %v1651, 4
        %v1667 = vsel %vm645, 0.0, %v1666
        %v1668 = vrot.slane %v1659, 4
        %v1669 = vsel %vm645, 0.0, %v1668
        %v1670 = vrot.slane %v1663, 4
        %v1671 = vsel %vm645, 0.0, %v1670
        %v1672 = vrot.slane %v1618, 4
        %v1673 = vsel %vm645, 0.0, %v1672
        %v1675 = vunpack.c.l.s4 1983009808
        %v1676 = vunpack.c.0.s8 %v1675
        %v1677 = vperm.slane %v1618, %v1676
        %v1679 = vunpack.c.l.s4 1983009808
        %v1680 = vunpack.c.0.s8 %v1679
        %v1681 = vperm.slane %v1673, %v1680
        %v1682 = vrot.slane %v1619, 4
        %v1683 = vsel %vm645, 0.0, %v1682
        %v1685 = vunpack.c.l.s4 1983009808
        %v1686 = vunpack.c.0.s8 %v1685
        %v1687 = vperm.slane %v1619, %v1686
        %v1689 = vunpack.c.l.s4 1983009808
        %v1690 = vunpack.c.0.s8 %v1689
        %v1691 = vperm.slane %v1683, %v1690
        %v1692 = vrot.slane %v1687, 4
        %v1693 = vsel %vm645, %v1692, %v1677
        %v1694 = vrot.slane %v1677, 4
        %v1695 = vsel %vm645, %v1687, %v1694
        %v1697 = vunpack.c.l.s4 1934713408
        %v1698 = vunpack.c.0.s8 %v1697
        %v1699 = vperm.slane %v1693, %v1698
        %v1701 = vunpack.c.l.s4 1934713408
        %v1702 = vunpack.c.0.s8 %v1701
        %v1703 = vperm.slane %v1695, %v1702
        %v1704 = vrot.slane %v1691, 4
        %v1705 = vsel %vm645, %v1704, %v1681
        %v1706 = vrot.slane %v1681, 4
        %v1707 = vsel %vm645, %v1691, %v1706
        %v1709 = vunpack.c.l.s4 1934713408
        %v1710 = vunpack.c.0.s8 %v1709
        %v1711 = vperm.slane %v1705, %v1710
        %v1713 = vunpack.c.l.s4 1934713408
        %v1714 = vunpack.c.0.s8 %v1713
        %v1715 = vperm.slane %v1707, %v1714
        %v1716 = vrot.slane %v1699, 4
        %v1717 = vsel %vm645, 0.0, %v1716
        %v1718 = vrot.slane %v1703, 4
        %v1719 = vsel %vm645, 0.0, %v1718
        %v1720 = vrot.slane %v1711, 4
        %v1721 = vsel %vm645, 0.0, %v1720
        %v1722 = vrot.slane %v1715, 4
        %v1723 = vsel %vm645, 0.0, %v1722
        %1726 = vrot.lane.b32.xlu0 %v1665, 8
        %v1727 = vpop.permute.xlu0 %1726
        %1728 = vrot.lane.b32.xlu0 %v1717, 8
        %v1729 = vpop.permute.xlu0 %1728
        %1734 = vrot.lane.b32.xlu0 %v1651, 16
        %v1735 = vpop.permute.xlu0 %1734
        %1736 = vrot.lane.b32.xlu0 %v1703, 16
        %v1737 = vpop.permute.xlu0 %1736
        %1742 = vrot.lane.b32.xlu0 %v1667, 24
        %v1743 = vpop.permute.xlu0 %1742
        %1744 = vrot.lane.b32.xlu0 %v1719, 24
        %v1745 = vpop.permute.xlu0 %1744
        %1750 = vrot.lane.b32.xlu0 %v1659, 32
        %v1751 = vpop.permute.xlu0 %1750
        %1752 = vrot.lane.b32.xlu0 %v1711, 32
        %v1753 = vpop.permute.xlu0 %1752
        %1758 = vrot.lane.b32.xlu0 %v1669, 40
        %v1759 = vpop.permute.xlu0 %1758
        %1760 = vrot.lane.b32.xlu0 %v1721, 40
        %v1761 = vpop.permute.xlu0 %1760
        %1766 = vrot.lane.b32.xlu0 %v1663, 48
        %v1767 = vpop.permute.xlu0 %1766
        %1768 = vrot.lane.b32.xlu0 %v1715, 48
        %v1769 = vpop.permute.xlu0 %1768
        %1774 = vrot.lane.b32.xlu0 %v1671, 56
        %v1775 = vpop.permute.xlu0 %1774
        %1776 = vrot.lane.b32.xlu0 %v1723, 56
        %v1777 = vpop.permute.xlu0 %1776
        %v1780 = vsel %vm443, %v1647, %v1727
        %v1781 = vsel %vm443, %v1699, %v1729
        %v1782 = vsel %vm807, %v1780, %v1735
        %v1783 = vsel %vm807, %v1781, %v1737
        %v1784 = vsel %vm810, %v1782, %v1743
        %v1785 = vsel %vm810, %v1783, %v1745
        %v1786 = vsel %vm334, %v1784, %v1751
        %v1787 = vsel %vm334, %v1785, %v1753
        %v1788 = vsel %vm815, %v1786, %v1759
        %v1789 = vsel %vm815, %v1787, %v1761
        %v1790 = vsel %vm818, %v1788, %v1767
        %v1791 = vsel %vm818, %v1789, %v1769
        %v1792 = vsel %vm821, %v1790, %v1775
        %v1793 = vsel %vm821, %v1791, %v1777
        %s1794 = scalar_lea.vmem %s312, 8 [#allocation7]
        %1795 = vst.msk [vmem:[%s1794] sm:$0x3] %vm824, %v1792
        %1796 = vst.msk [vmem:[%s1794 + $0x2] sm:$0x3] %vm824, %v1793
        %1797 = vrot.lane.b32.xlu0 %v431, 112
        %v1798 = vpop.permute.xlu0 %1797
        %v1801 = vsel %vm443, %v1616, 0
        %1803 = vmatpush.msra.mxu0 0.0
        %1804 = vmatpush.msra.mxu0 0.0
        %1805 = vmatpush.msra.mxu0 0.0
        %1806 = vmatpush.msra.mxu0 0.0
        %1807 = vmatpush.msra.mxu0 0.0
        %1808 = vmatpush.msra.mxu0 0.0
        %1809 = vmatpush.msra.mxu0 0.0
        %1810 = vmatpush.msra.mxu0 0.0
        %1811 = vmatpush.msra.mxu0 0.0
        %1812 = vmatpush.msra.mxu0 0.0
        %1813 = vmatpush.msra.mxu0 0.0
        %1814 = vmatpush.msra.mxu0 0.0
        %1815 = vmatpush.msra.mxu0 0.0
        %1816 = vmatpush.msra.mxu0 0.0
        %1817 = vmatpush.msra.mxu0 0.0
        %1818 = vmatpush.msra.mxu0 %v1798
        %1819 = vmatmul.f32.gmra.mxu0 %v1801
        %v1820 = vpop.f32.mrf.mxu0
        %v1821 = vadd.f32 0.0, %v1820
        %1822 = vdwg.mxu0
        %1823 = vrot.lane.b32.xlu0 %v434, 112
        %v1824 = vpop.permute.xlu0 %1823
        %v1827 = vsel %vm443, %v1617, 0
        %1829 = vmatpush.msra.mxu0 0.0
        %1830 = vmatpush.msra.mxu0 0.0
        %1831 = vmatpush.msra.mxu0 0.0
        %1832 = vmatpush.msra.mxu0 0.0
        %1833 = vmatpush.msra.mxu0 0.0
        %1834 = vmatpush.msra.mxu0 0.0
        %1835 = vmatpush.msra.mxu0 0.0
        %1836 = vmatpush.msra.mxu0 0.0
        %1837 = vmatpush.msra.mxu0 0.0
        %1838 = vmatpush.msra.mxu0 0.0
        %1839 = vmatpush.msra.mxu0 0.0
        %1840 = vmatpush.msra.mxu0 0.0
        %1841 = vmatpush.msra.mxu0 0.0
        %1842 = vmatpush.msra.mxu0 0.0
        %1843 = vmatpush.msra.mxu0 0.0
        %1844 = vmatpush.msra.mxu0 %v1824
        %1845 = vmatmul.f32.gmra.mxu0 %v1827
        %v1846 = vpop.f32.mrf.mxu0
        %v1847 = vadd.f32 0.0, %v1846
        %1848 = vdwg.mxu0
        %1849 = vrot.lane.b32.xlu0 %v437, 112
        %v1850 = vpop.permute.xlu0 %1849
        %v1853 = vsel %vm443, %v1618, 0
        %1855 = vmatpush.msra.mxu0 0.0
        %1856 = vmatpush.msra.mxu0 0.0
        %1857 = vmatpush.msra.mxu0 0.0
        %1858 = vmatpush.msra.mxu0 0.0
        %1859 = vmatpush.msra.mxu0 0.0
        %1860 = vmatpush.msra.mxu0 0.0
        %1861 = vmatpush.msra.mxu0 0.0
        %1862 = vmatpush.msra.mxu0 0.0
        %1863 = vmatpush.msra.mxu0 0.0
        %1864 = vmatpush.msra.mxu0 0.0
        %1865 = vmatpush.msra.mxu0 0.0
        %1866 = vmatpush.msra.mxu0 0.0
        %1867 = vmatpush.msra.mxu0 0.0
        %1868 = vmatpush.msra.mxu0 0.0
        %1869 = vmatpush.msra.mxu0 0.0
        %1870 = vmatpush.msra.mxu0 %v1850
        %1871 = vmatmul.f32.gmra.mxu0 %v1853
        %v1872 = vpop.f32.mrf.mxu0
        %v1873 = vadd.f32 0.0, %v1872
        %1874 = vdwg.mxu0
        %1875 = vrot.lane.b32.xlu0 %v440, 112
        %v1876 = vpop.permute.xlu0 %1875
        %v1879 = vsel %vm443, %v1619, 0
        %1881 = vmatpush.msra.mxu0 0.0
        %1882 = vmatpush.msra.mxu0 0.0
        %1883 = vmatpush.msra.mxu0 0.0
        %1884 = vmatpush.msra.mxu0 0.0
        %1885 = vmatpush.msra.mxu0 0.0
        %1886 = vmatpush.msra.mxu0 0.0
        %1887 = vmatpush.msra.mxu0 0.0
        %1888 = vmatpush.msra.mxu0 0.0
        %1889 = vmatpush.msra.mxu0 0.0
        %1890 = vmatpush.msra.mxu0 0.0
        %1891 = vmatpush.msra.mxu0 0.0
        %1892 = vmatpush.msra.mxu0 0.0
        %1893 = vmatpush.msra.mxu0 0.0
        %1894 = vmatpush.msra.mxu0 0.0
        %1895 = vmatpush.msra.mxu0 0.0
        %1896 = vmatpush.msra.mxu0 %v1876
        %1897 = vmatmul.f32.gmra.mxu0 %v1879
        %v1898 = vpop.f32.mrf.mxu0
        %v1899 = vadd.f32 0.0, %v1898
        %1900 = vdwg.mxu0
        %1901 = vrot.lane.b32.xlu0 %v365, 104
        %v1902 = vpop.permute.xlu0 %1901
        %1903 = vrot.lane.b32.xlu0 %v398, 104
        %v1904 = vpop.permute.xlu0 %1903
        %v1905 = vsel %vm443, %v1902, 0
        %v1907 = vsel %vm443, %v1904, 0
        %1909 = vmatpush.xpose.msra.mxu0 0.0
        %1910 = vmatpush.xpose.msra.mxu0 0.0
        %1911 = vmatpush.xpose.msra.mxu0 0.0
        %1912 = vmatpush.xpose.msra.mxu0 0.0
        %1913 = vmatpush.xpose.msra.mxu0 0.0
        %1914 = vmatpush.xpose.msra.mxu0 0.0
        %1915 = vmatpush.xpose.msra.mxu0 0.0
        %1916 = vmatpush.xpose.msra.mxu0 0.0
        %1917 = vmatpush.xpose.msra.mxu0 0.0
        %1918 = vmatpush.xpose.msra.mxu0 0.0
        %1919 = vmatpush.xpose.msra.mxu0 0.0
        %1920 = vmatpush.xpose.msra.mxu0 0.0
        %1921 = vmatpush.xpose.msra.mxu0 0.0
        %1922 = vmatpush.xpose.msra.mxu0 0.0
        %1923 = vmatpush.xpose.msra.mxu0 0.0
        %1924 = vmatpush.xpose.msra.mxu0 %v1907
        %1925 = vmatmul.f32.gmra.mxu0 %v1905
        %v1926 = vpop.f32.mrf.mxu0
        %v1927 = vadd.f32 %v442, %v1926
        %1928 = vdwg.mxu0
        %1929 = vrot.lane.b32.xlu0 %v368, 104
        %v1930 = vpop.permute.xlu0 %1929
        %1931 = vrot.lane.b32.xlu0 %v401, 104
        %v1932 = vpop.permute.xlu0 %1931
        %v1933 = vsel %vm443, %v1930, 0
        %v1935 = vsel %vm443, %v1932, 0
        %1937 = vmatpush.xpose.msra.mxu0 0.0
        %1938 = vmatpush.xpose.msra.mxu0 0.0
        %1939 = vmatpush.xpose.msra.mxu0 0.0
        %1940 = vmatpush.xpose.msra.mxu0 0.0
        %1941 = vmatpush.xpose.msra.mxu0 0.0
        %1942 = vmatpush.xpose.msra.mxu0 0.0
        %1943 = vmatpush.xpose.msra.mxu0 0.0
        %1944 = vmatpush.xpose.msra.mxu0 0.0
        %1945 = vmatpush.xpose.msra.mxu0 0.0
        %1946 = vmatpush.xpose.msra.mxu0 0.0
        %1947 = vmatpush.xpose.msra.mxu0 0.0
        %1948 = vmatpush.xpose.msra.mxu0 0.0
        %1949 = vmatpush.xpose.msra.mxu0 0.0
        %1950 = vmatpush.xpose.msra.mxu0 0.0
        %1951 = vmatpush.xpose.msra.mxu0 0.0
        %1952 = vmatpush.xpose.msra.mxu0 %v1935
        %1953 = vmatmul.f32.gmra.mxu0 %v1933
        %v1954 = vpop.f32.mrf.mxu0
        %v1955 = vadd.f32 %v442, %v1954
        %1956 = vdwg.mxu0
        %1957 = vrot.lane.b32.xlu0 %v371, 104
        %v1958 = vpop.permute.xlu0 %1957
        %1959 = vrot.lane.b32.xlu0 %v404, 104
        %v1960 = vpop.permute.xlu0 %1959
        %v1961 = vsel %vm443, %v1958, 0
        %v1963 = vsel %vm443, %v1960, 0
        %1965 = vmatpush.xpose.msra.mxu0 0.0
        %1966 = vmatpush.xpose.msra.mxu0 0.0
        %1967 = vmatpush.xpose.msra.mxu0 0.0
        %1968 = vmatpush.xpose.msra.mxu0 0.0
        %1969 = vmatpush.xpose.msra.mxu0 0.0
        %1970 = vmatpush.xpose.msra.mxu0 0.0
        %1971 = vmatpush.xpose.msra.mxu0 0.0
        %1972 = vmatpush.xpose.msra.mxu0 0.0
        %1973 = vmatpush.xpose.msra.mxu0 0.0
        %1974 = vmatpush.xpose.msra.mxu0 0.0
        %1975 = vmatpush.xpose.msra.mxu0 0.0
        %1976 = vmatpush.xpose.msra.mxu0 0.0
        %1977 = vmatpush.xpose.msra.mxu0 0.0
        %1978 = vmatpush.xpose.msra.mxu0 0.0
        %1979 = vmatpush.xpose.msra.mxu0 0.0
        %1980 = vmatpush.xpose.msra.mxu0 %v1963
        %1981 = vmatmul.f32.gmra.mxu0 %v1961
        %v1982 = vpop.f32.mrf.mxu0
        %v1983 = vadd.f32 %v442, %v1982
        %1984 = vdwg.mxu0
        %1985 = vrot.lane.b32.xlu0 %v374, 104
        %v1986 = vpop.permute.xlu0 %1985
        %1987 = vrot.lane.b32.xlu0 %v407, 104
        %v1988 = vpop.permute.xlu0 %1987
        %v1989 = vsel %vm443, %v1986, 0
        %v1991 = vsel %vm443, %v1988, 0
        %1993 = vmatpush.xpose.msra.mxu0 0.0
        %1994 = vmatpush.xpose.msra.mxu0 0.0
        %1995 = vmatpush.xpose.msra.mxu0 0.0
        %1996 = vmatpush.xpose.msra.mxu0 0.0
        %1997 = vmatpush.xpose.msra.mxu0 0.0
        %1998 = vmatpush.xpose.msra.mxu0 0.0
        %1999 = vmatpush.xpose.msra.mxu0 0.0
        %2000 = vmatpush.xpose.msra.mxu0 0.0
        %2001 = vmatpush.xpose.msra.mxu0 0.0
        %2002 = vmatpush.xpose.msra.mxu0 0.0
        %2003 = vmatpush.xpose.msra.mxu0 0.0
        %2004 = vmatpush.xpose.msra.mxu0 0.0
        %2005 = vmatpush.xpose.msra.mxu0 0.0
        %2006 = vmatpush.xpose.msra.mxu0 0.0
        %2007 = vmatpush.xpose.msra.mxu0 0.0
        %2008 = vmatpush.xpose.msra.mxu0 %v1991
        %2009 = vmatmul.f32.gmra.mxu0 %v1989
        %v2010 = vpop.f32.mrf.mxu0
        %v2011 = vadd.f32 %v442, %v2010
        %2012 = vdwg.mxu0
        %v2013 = vsel %vm443, %v1927, -inf
        %2014 = vmax.xlane.f32.xlu0 %v2013
        %v2015 = vpop.xlane.xlu0 %2014
        %v2016 = vsel %vm443, %v1955, -inf
        %2017 = vmax.xlane.f32.xlu0 %v2016
        %v2018 = vpop.xlane.xlu0 %2017
        %v2019 = vsel %vm443, %v1983, -inf
        %2020 = vmax.xlane.f32.xlu0 %v2019
        %v2021 = vpop.xlane.xlu0 %2020
        %v2022 = vsel %vm443, %v2011, -inf
        %2023 = vmax.xlane.f32.xlu0 %v2022
        %v2024 = vpop.xlane.xlu0 %2023
        %v2025 = vsub.f32 %v1927, %v2015
        %v2026 = vsub.f32 %v1955, %v2018
        %v2027 = vsub.f32 %v1983, %v2021
        %v2028 = vsub.f32 %v2011, %v2024
        %v2029 = vmul.f32 %v2025, 1.442695
        %v2030 = vpow.pop %v2029
        %v2031 = vmul.f32 %v2026, 1.442695
        %v2032 = vpow.pop %v2031
        %v2033 = vmul.f32 %v2027, 1.442695
        %v2034 = vpow.pop %v2033
        %v2035 = vmul.f32 %v2028, 1.442695
        %v2036 = vpow.pop %v2035
        %v2037 = vsel %vm443, %v2030, 0.0
        %2038 = vadd.xlane.f32.xlu0 %v2037
        %v2039 = vpop.xlane.xlu0 %2038
        %v2040 = vsel %vm443, %v2032, 0.0
        %2041 = vadd.xlane.f32.xlu0 %v2040
        %v2042 = vpop.xlane.xlu0 %2041
        %v2043 = vsel %vm443, %v2034, 0.0
        %2044 = vadd.xlane.f32.xlu0 %v2043
        %v2045 = vpop.xlane.xlu0 %2044
        %v2046 = vsel %vm443, %v2036, 0.0
        %2047 = vadd.xlane.f32.xlu0 %v2046
        %v2048 = vpop.xlane.xlu0 %2047
        %v2049 = vrcp.pop %v2039
        %v2050 = vmul.f32 %v2039, %v2049
        %v2051 = vsub.f32 1.0, %v2050
        %v2052 = vmul.f32 %v2049, %v2051
        %v2053 = vadd.f32 %v2049, %v2052
        %vm2054 = vweird.f32 %v2039
        %vm2055 = vweird.f32 %v2049
        %vm2056 = vmor %vm2054, %vm2055
        %v2057 = vsel %vm2056, %v2049, %v2053
        %v2058 = vand.u32 2147483647, %v2039
        %vm2059 = vcmp.eq.f32.partialorder %v2058, 8.507059e+37
        %v2060 = vand.u32 %v2039, 2147483648
        %v2061 = vor.u32 1.1754944e-38, %v2060
        %v2062 = vsel %vm2059, %v2061, %v2057
        %v2063 = vrcp.pop %v2042
        %v2064 = vmul.f32 %v2042, %v2063
        %v2065 = vsub.f32 1.0, %v2064
        %v2066 = vmul.f32 %v2063, %v2065
        %v2067 = vadd.f32 %v2063, %v2066
        %vm2068 = vweird.f32 %v2042
        %vm2069 = vweird.f32 %v2063
        %vm2070 = vmor %vm2068, %vm2069
        %v2071 = vsel %vm2070, %v2063, %v2067
        %v2072 = vand.u32 2147483647, %v2042
        %vm2073 = vcmp.eq.f32.partialorder %v2072, 8.507059e+37
        %v2074 = vand.u32 %v2042, 2147483648
        %v2075 = vor.u32 1.1754944e-38, %v2074
        %v2076 = vsel %vm2073, %v2075, %v2071
        %v2077 = vrcp.pop %v2045
        %v2078 = vmul.f32 %v2045, %v2077
        %v2079 = vsub.f32 1.0, %v2078
        %v2080 = vmul.f32 %v2077, %v2079
        %v2081 = vadd.f32 %v2077, %v2080
        %vm2082 = vweird.f32 %v2045
        %vm2083 = vweird.f32 %v2077
        %vm2084 = vmor %vm2082, %vm2083
        %v2085 = vsel %vm2084, %v2077, %v2081
        %v2086 = vand.u32 2147483647, %v2045
        %vm2087 = vcmp.eq.f32.partialorder %v2086, 8.507059e+37
        %v2088 = vand.u32 %v2045, 2147483648
        %v2089 = vor.u32 1.1754944e-38, %v2088
        %v2090 = vsel %vm2087, %v2089, %v2085
        %v2091 = vrcp.pop %v2048
        %v2092 = vmul.f32 %v2048, %v2091
        %v2093 = vsub.f32 1.0, %v2092
        %v2094 = vmul.f32 %v2091, %v2093
        %v2095 = vadd.f32 %v2091, %v2094
        %vm2096 = vweird.f32 %v2048
        %vm2097 = vweird.f32 %v2091
        %vm2098 = vmor %vm2096, %vm2097
        %v2099 = vsel %vm2098, %v2091, %v2095
        %v2100 = vand.u32 2147483647, %v2048
        %vm2101 = vcmp.eq.f32.partialorder %v2100, 8.507059e+37
        %v2102 = vand.u32 %v2048, 2147483648
        %v2103 = vor.u32 1.1754944e-38, %v2102
        %v2104 = vsel %vm2101, %v2103, %v2099
        %v2105 = vmul.f32 %v2030, %v2062
        %v2106 = vmul.f32 %v2032, %v2076
        %v2107 = vmul.f32 %v2034, %v2090
        %v2108 = vmul.f32 %v2036, %v2104
        %v2109 = vrot.slane %v2105, 4
        %v2110 = vsel %vm645, 0.0, %v2109
        %v2112 = vunpack.c.l.s4 1983009808
        %v2113 = vunpack.c.0.s8 %v2112
        %v2114 = vperm.slane %v2105, %v2113
        %v2116 = vunpack.c.l.s4 1983009808
        %v2117 = vunpack.c.0.s8 %v2116
        %v2118 = vperm.slane %v2110, %v2117
        %v2119 = vrot.slane %v2106, 4
        %v2120 = vsel %vm645, 0.0, %v2119
        %v2122 = vunpack.c.l.s4 1983009808
        %v2123 = vunpack.c.0.s8 %v2122
        %v2124 = vperm.slane %v2106, %v2123
        %v2126 = vunpack.c.l.s4 1983009808
        %v2127 = vunpack.c.0.s8 %v2126
        %v2128 = vperm.slane %v2120, %v2127
        %v2129 = vrot.slane %v2124, 4
        %v2130 = vsel %vm645, %v2129, %v2114
        %v2131 = vrot.slane %v2114, 4
        %v2132 = vsel %vm645, %v2124, %v2131
        %v2134 = vunpack.c.l.s4 1934713408
        %v2135 = vunpack.c.0.s8 %v2134
        %v2136 = vperm.slane %v2130, %v2135
        %v2138 = vunpack.c.l.s4 1934713408
        %v2139 = vunpack.c.0.s8 %v2138
        %v2140 = vperm.slane %v2132, %v2139
        %v2141 = vrot.slane %v2128, 4
        %v2142 = vsel %vm645, %v2141, %v2118
        %v2143 = vrot.slane %v2118, 4
        %v2144 = vsel %vm645, %v2128, %v2143
        %v2146 = vunpack.c.l.s4 1934713408
        %v2147 = vunpack.c.0.s8 %v2146
        %v2148 = vperm.slane %v2142, %v2147
        %v2150 = vunpack.c.l.s4 1934713408
        %v2151 = vunpack.c.0.s8 %v2150
        %v2152 = vperm.slane %v2144, %v2151
        %v2153 = vrot.slane %v2136, 4
        %v2154 = vsel %vm645, 0.0, %v2153
        %v2155 = vrot.slane %v2140, 4
        %v2156 = vsel %vm645, 0.0, %v2155
        %v2157 = vrot.slane %v2148, 4
        %v2158 = vsel %vm645, 0.0, %v2157
        %v2159 = vrot.slane %v2152, 4
        %v2160 = vsel %vm645, 0.0, %v2159
        %v2161 = vrot.slane %v2107, 4
        %v2162 = vsel %vm645, 0.0, %v2161
        %v2164 = vunpack.c.l.s4 1983009808
        %v2165 = vunpack.c.0.s8 %v2164
        %v2166 = vperm.slane %v2107, %v2165
        %v2168 = vunpack.c.l.s4 1983009808
        %v2169 = vunpack.c.0.s8 %v2168
        %v2170 = vperm.slane %v2162, %v2169
        %v2171 = vrot.slane %v2108, 4
        %v2172 = vsel %vm645, 0.0, %v2171
        %v2174 = vunpack.c.l.s4 1983009808
        %v2175 = vunpack.c.0.s8 %v2174
        %v2176 = vperm.slane %v2108, %v2175
        %v2178 = vunpack.c.l.s4 1983009808
        %v2179 = vunpack.c.0.s8 %v2178
        %v2180 = vperm.slane %v2172, %v2179
        %v2181 = vrot.slane %v2176, 4
        %v2182 = vsel %vm645, %v2181, %v2166
        %v2183 = vrot.slane %v2166, 4
        %v2184 = vsel %vm645, %v2176, %v2183
        %v2186 = vunpack.c.l.s4 1934713408
        %v2187 = vunpack.c.0.s8 %v2186
        %v2188 = vperm.slane %v2182, %v2187
        %v2190 = vunpack.c.l.s4 1934713408
        %v2191 = vunpack.c.0.s8 %v2190
        %v2192 = vperm.slane %v2184, %v2191
        %v2193 = vrot.slane %v2180, 4
        %v2194 = vsel %vm645, %v2193, %v2170
        %v2195 = vrot.slane %v2170, 4
        %v2196 = vsel %vm645, %v2180, %v2195
        %v2198 = vunpack.c.l.s4 1934713408
        %v2199 = vunpack.c.0.s8 %v2198
        %v2200 = vperm.slane %v2194, %v2199
        %v2202 = vunpack.c.l.s4 1934713408
        %v2203 = vunpack.c.0.s8 %v2202
        %v2204 = vperm.slane %v2196, %v2203
        %v2205 = vrot.slane %v2188, 4
        %v2206 = vsel %vm645, 0.0, %v2205
        %v2207 = vrot.slane %v2192, 4
        %v2208 = vsel %vm645, 0.0, %v2207
        %v2209 = vrot.slane %v2200, 4
        %v2210 = vsel %vm645, 0.0, %v2209
        %v2211 = vrot.slane %v2204, 4
        %v2212 = vsel %vm645, 0.0, %v2211
        %2215 = vrot.lane.b32.xlu0 %v2154, 8
        %v2216 = vpop.permute.xlu0 %2215
        %2217 = vrot.lane.b32.xlu0 %v2206, 8
        %v2218 = vpop.permute.xlu0 %2217
        %2223 = vrot.lane.b32.xlu0 %v2140, 16
        %v2224 = vpop.permute.xlu0 %2223
        %2225 = vrot.lane.b32.xlu0 %v2192, 16
        %v2226 = vpop.permute.xlu0 %2225
        %2231 = vrot.lane.b32.xlu0 %v2156, 24
        %v2232 = vpop.permute.xlu0 %2231
        %2233 = vrot.lane.b32.xlu0 %v2208, 24
        %v2234 = vpop.permute.xlu0 %2233
        %2239 = vrot.lane.b32.xlu0 %v2148, 32
        %v2240 = vpop.permute.xlu0 %2239
        %2241 = vrot.lane.b32.xlu0 %v2200, 32
        %v2242 = vpop.permute.xlu0 %2241
        %2247 = vrot.lane.b32.xlu0 %v2158, 40
        %v2248 = vpop.permute.xlu0 %2247
        %2249 = vrot.lane.b32.xlu0 %v2210, 40
        %v2250 = vpop.permute.xlu0 %2249
        %2255 = vrot.lane.b32.xlu0 %v2152, 48
        %v2256 = vpop.permute.xlu0 %2255
        %2257 = vrot.lane.b32.xlu0 %v2204, 48
        %v2258 = vpop.permute.xlu0 %2257
        %2263 = vrot.lane.b32.xlu0 %v2160, 56
        %v2264 = vpop.permute.xlu0 %2263
        %2265 = vrot.lane.b32.xlu0 %v2212, 56
        %v2266 = vpop.permute.xlu0 %2265
        %v2269 = vsel %vm443, %v2136, %v2216
        %v2270 = vsel %vm443, %v2188, %v2218
        %v2271 = vsel %vm807, %v2269, %v2224
        %v2272 = vsel %vm807, %v2270, %v2226
        %v2273 = vsel %vm810, %v2271, %v2232
        %v2274 = vsel %vm810, %v2272, %v2234
        %v2275 = vsel %vm334, %v2273, %v2240
        %v2276 = vsel %vm334, %v2274, %v2242
        %v2277 = vsel %vm815, %v2275, %v2248
        %v2278 = vsel %vm815, %v2276, %v2250
        %v2279 = vsel %vm818, %v2277, %v2256
        %v2280 = vsel %vm818, %v2278, %v2258
        %v2281 = vsel %vm821, %v2279, %v2264
        %v2282 = vsel %vm821, %v2280, %v2266
        %s2283 = scalar_lea.vmem %s312, 12 [#allocation7]
        %2284 = vst.msk [vmem:[%s2283] sm:$0x3] %vm824, %v2281
        %2285 = vst.msk [vmem:[%s2283 + $0x2] sm:$0x3] %vm824, %v2282
        %2286 = vrot.lane.b32.xlu0 %v431, 104
        %v2287 = vpop.permute.xlu0 %2286
        %v2290 = vsel %vm443, %v2105, 0
        %2292 = vmatpush.msra.mxu0 0.0
        %2293 = vmatpush.msra.mxu0 0.0
        %2294 = vmatpush.msra.mxu0 0.0
        %2295 = vmatpush.msra.mxu0 0.0
        %2296 = vmatpush.msra.mxu0 0.0
        %2297 = vmatpush.msra.mxu0 0.0
        %2298 = vmatpush.msra.mxu0 0.0
        %2299 = vmatpush.msra.mxu0 0.0
        %2300 = vmatpush.msra.mxu0 0.0
        %2301 = vmatpush.msra.mxu0 0.0
        %2302 = vmatpush.msra.mxu0 0.0
        %2303 = vmatpush.msra.mxu0 0.0
        %2304 = vmatpush.msra.mxu0 0.0
        %2305 = vmatpush.msra.mxu0 0.0
        %2306 = vmatpush.msra.mxu0 0.0
        %2307 = vmatpush.msra.mxu0 %v2287
        %2308 = vmatmul.f32.gmra.mxu0 %v2290
        %v2309 = vpop.f32.mrf.mxu0
        %v2310 = vadd.f32 0.0, %v2309
        %2311 = vdwg.mxu0
        %2312 = vrot.lane.b32.xlu0 %v434, 104
        %v2313 = vpop.permute.xlu0 %2312
        %v2316 = vsel %vm443, %v2106, 0
        %2318 = vmatpush.msra.mxu0 0.0
        %2319 = vmatpush.msra.mxu0 0.0
        %2320 = vmatpush.msra.mxu0 0.0
        %2321 = vmatpush.msra.mxu0 0.0
        %2322 = vmatpush.msra.mxu0 0.0
        %2323 = vmatpush.msra.mxu0 0.0
        %2324 = vmatpush.msra.mxu0 0.0
        %2325 = vmatpush.msra.mxu0 0.0
        %2326 = vmatpush.msra.mxu0 0.0
        %2327 = vmatpush.msra.mxu0 0.0
        %2328 = vmatpush.msra.mxu0 0.0
        %2329 = vmatpush.msra.mxu0 0.0
        %2330 = vmatpush.msra.mxu0 0.0
        %2331 = vmatpush.msra.mxu0 0.0
        %2332 = vmatpush.msra.mxu0 0.0
        %2333 = vmatpush.msra.mxu0 %v2313
        %2334 = vmatmul.f32.gmra.mxu0 %v2316
        %v2335 = vpop.f32.mrf.mxu0
        %v2336 = vadd.f32 0.0, %v2335
        %2337 = vdwg.mxu0
        %2338 = vrot.lane.b32.xlu0 %v437, 104
        %v2339 = vpop.permute.xlu0 %2338
        %v2342 = vsel %vm443, %v2107, 0
        %2344 = vmatpush.msra.mxu0 0.0
        %2345 = vmatpush.msra.mxu0 0.0
        %2346 = vmatpush.msra.mxu0 0.0
        %2347 = vmatpush.msra.mxu0 0.0
        %2348 = vmatpush.msra.mxu0 0.0
        %2349 = vmatpush.msra.mxu0 0.0
        %2350 = vmatpush.msra.mxu0 0.0
        %2351 = vmatpush.msra.mxu0 0.0
        %2352 = vmatpush.msra.mxu0 0.0
        %2353 = vmatpush.msra.mxu0 0.0
        %2354 = vmatpush.msra.mxu0 0.0
        %2355 = vmatpush.msra.mxu0 0.0
        %2356 = vmatpush.msra.mxu0 0.0
        %2357 = vmatpush.msra.mxu0 0.0
        %2358 = vmatpush.msra.mxu0 0.0
        %2359 = vmatpush.msra.mxu0 %v2339
        %2360 = vmatmul.f32.gmra.mxu0 %v2342
        %v2361 = vpop.f32.mrf.mxu0
        %v2362 = vadd.f32 0.0, %v2361
        %2363 = vdwg.mxu0
        %2364 = vrot.lane.b32.xlu0 %v440, 104
        %v2365 = vpop.permute.xlu0 %2364
        %v2368 = vsel %vm443, %v2108, 0
        %2370 = vmatpush.msra.mxu0 0.0
        %2371 = vmatpush.msra.mxu0 0.0
        %2372 = vmatpush.msra.mxu0 0.0
        %2373 = vmatpush.msra.mxu0 0.0
        %2374 = vmatpush.msra.mxu0 0.0
        %2375 = vmatpush.msra.mxu0 0.0
        %2376 = vmatpush.msra.mxu0 0.0
        %2377 = vmatpush.msra.mxu0 0.0
        %2378 = vmatpush.msra.mxu0 0.0
        %2379 = vmatpush.msra.mxu0 0.0
        %2380 = vmatpush.msra.mxu0 0.0
        %2381 = vmatpush.msra.mxu0 0.0
        %2382 = vmatpush.msra.mxu0 0.0
        %2383 = vmatpush.msra.mxu0 0.0
        %2384 = vmatpush.msra.mxu0 0.0
        %2385 = vmatpush.msra.mxu0 %v2365
        %2386 = vmatmul.f32.gmra.mxu0 %v2368
        %v2387 = vpop.f32.mrf.mxu0
        %v2388 = vadd.f32 0.0, %v2387
        %2389 = vdwg.mxu0
        %2394 = vrot.lane.b32.xlu0 %v1329, 8
        %v2395 = vpop.permute.xlu0 %2394
        %2396 = vrot.lane.b32.xlu0 %v1356, 8
        %v2397 = vpop.permute.xlu0 %2396
        %2398 = vrot.lane.b32.xlu0 %v1383, 8
        %v2399 = vpop.permute.xlu0 %2398
        %2400 = vrot.lane.b32.xlu0 %v1410, 8
        %v2401 = vpop.permute.xlu0 %2400
        %2410 = vrot.lane.b32.xlu0 %v1821, 16
        %v2411 = vpop.permute.xlu0 %2410
        %2412 = vrot.lane.b32.xlu0 %v1847, 16
        %v2413 = vpop.permute.xlu0 %2412
        %2414 = vrot.lane.b32.xlu0 %v1873, 16
        %v2415 = vpop.permute.xlu0 %2414
        %2416 = vrot.lane.b32.xlu0 %v1899, 16
        %v2417 = vpop.permute.xlu0 %2416
        %2426 = vrot.lane.b32.xlu0 %v2310, 24
        %v2427 = vpop.permute.xlu0 %2426
        %2428 = vrot.lane.b32.xlu0 %v2336, 24
        %v2429 = vpop.permute.xlu0 %2428
        %2430 = vrot.lane.b32.xlu0 %v2362, 24
        %v2431 = vpop.permute.xlu0 %2430
        %2432 = vrot.lane.b32.xlu0 %v2388, 24
        %v2433 = vpop.permute.xlu0 %2432
        %v2438 = vsel %vm443, %v848, %v2395
        %v2439 = vsel %vm443, %v871, %v2397
        %v2440 = vsel %vm443, %v894, %v2399
        %v2441 = vsel %vm443, %v917, %v2401
        %v2442 = vsel %vm807, %v2438, %v2411
        %v2443 = vsel %vm807, %v2439, %v2413
        %v2444 = vsel %vm807, %v2440, %v2415
        %v2445 = vsel %vm807, %v2441, %v2417
        %v2446 = vsel %vm810, %v2442, %v2427
        %v2447 = vsel %vm810, %v2443, %v2429
        %v2448 = vsel %vm810, %v2444, %v2431
        %v2449 = vsel %vm810, %v2445, %v2433
        %v2450 = vld [vmem:[#allocation2] sm:$0xff]
        %v2451 = vld [vmem:[#allocation2 + $0x8] sm:$0xff]
        %v2452 = vld [vmem:[#allocation2 + $0x10] sm:$0xff]
        %v2453 = vld [vmem:[#allocation2 + $0x18] sm:$0xff]
        %v2455 = vsel %vm334, %v2446, 0
        %v2458 = vsel %vm334, %v2447, 0
        %v2461 = vsel %vm334, %v2448, 0
        %v2464 = vsel %vm334, %v2449, 0
        %2466 = vmatpush.msra.mxu0 0.0
        %2467 = vmatpush.msra.mxu0 0.0
        %2468 = vmatpush.msra.mxu0 0.0
        %2469 = vmatpush.msra.mxu0 0.0
        %2470 = vmatpush.msra.mxu0 0.0
        %2471 = vmatpush.msra.mxu0 0.0
        %2472 = vmatpush.msra.mxu0 0.0
        %2473 = vmatpush.msra.mxu0 0.0
        %2474 = vmatpush.msra.mxu0 0.0
        %2475 = vmatpush.msra.mxu0 0.0
        %2476 = vmatpush.msra.mxu0 0.0
        %2477 = vmatpush.msra.mxu0 0.0
        %2478 = vmatpush.msra.mxu0 %v2453
        %2479 = vmatpush.msra.mxu0 %v2452
        %2480 = vmatpush.msra.mxu0 %v2451
        %2481 = vmatpush.msra.mxu0 %v2450
        %2482 = vmatmul.f32.gmra.mxu0 %v2455
        %v2483 = vpop.f32.mrf.mxu0
        %v2484 = vadd.f32 0.0, %v2483
        %2485 = vmatmul.f32.gmra.mxu0 %v2458
        %v2486 = vpop.f32.mrf.mxu0
        %v2487 = vadd.f32 0.0, %v2486
        %2488 = vmatmul.f32.gmra.mxu0 %v2461
        %v2489 = vpop.f32.mrf.mxu0
        %v2490 = vadd.f32 0.0, %v2489
        %2491 = vmatmul.f32.gmra.mxu0 %v2464
        %v2492 = vpop.f32.mrf.mxu0
        %v2493 = vadd.f32 0.0, %v2492
        %2494 = vdwg.mxu0
        %2495 = vst.msk [vmem:[%s323] sm:$0xff] %vm334, %v2484
        %2496 = vst.msk [vmem:[%s323 + $0x8] sm:$0xff] %vm334, %v2487
        %2497 = vst.msk [vmem:[%s323 + $0x10] sm:$0xff] %vm334, %v2490
        %2498 = vst.msk [vmem:[%s323 + $0x18] sm:$0xff] %vm334, %v2493
        %s2499 = smul.u32 4, %s24
        %p2500 = scmp.lt.s32.totalorder %s2499, 7
        %s2501 = scalar_select %p2500, %s2499, 7
        %s2502 = smul.addr %s2501, 8
        %s2503 = scalar_lea.vmem %s6, %s2502
        %s2504 = sand.u32 %s189, 1
        %s2505 = scalar_lea.sflag [#allocation4], %s2504
        %s2506 = sand.u32 %s189, 1
        %s2507 = smul.addr %s2506, 16
        %s2508 = scalar_lea.vmem [#allocation7], %s2507
        // Predicated region
        $region53: #{tpu_custom_call.1} parent=43 // pred_check
          %p2509 = pneg %p173
        $region54: #{tpu_custom_call.1} parent=43 // pred_check_branch
          %2511 = sbr.rel (%p2509) target = $region56
        $region55: #{tpu_custom_call.1} parent=43 // pred_region
          %s2512 = smul.u32 4, %s24
        $region56: #{tpu_custom_call.1} parent=43 // pred_fallthru
          _
        // Predicated region
        $region57: #{tpu_custom_call.1} parent=43 // pred_check
          %p2513 = pneg %p199
        $region58: #{tpu_custom_call.1} parent=43 // pred_check_branch
          %2515 = sbr.rel (%p2513) target = $region60
        $region59: #{tpu_custom_call.1} parent=43 // pred_region
          #allocation9 [shape = 'u32[6]{0}', space=smem, size = 0x18, scoped, tag = 'DMA stride descriptor']
          %s2516 = smul.u32 2, %s24
          %2518 = vsyncadd %s2505, 0
          %s2519 = smul.addr %s2516, 2
          %s2520 = scalar_lea.hbm %s7, %s2519
          %s2522 = sshll.u32 1, 14
          %s2523 = sxor.u32 4294967295, %s2522
          %s2526 = sshll.u32 7, 18
          %s2527 = sxor.u32 4294967295, %s2526
          %s2528 = sand.u32 0, %s2527
          %s2530 = sor.u32 %s2528, 0
          %s2531 = sshll.u32 %s2508, 4
          %s2532 = int_to_ptr.vmem [resolvable:$true] %s2531
          %s2533 = sshll.u32 %s2520, 4
          %s2534 = int_to_ptr.hbm [resolvable:$true] %s2533
          %2540 = sst [smem:[#allocation9]] 64
          %s2541 = scalar_lea.smem [#allocation9], 1
          %2542 = sst [smem:[%s2541]] 128
          %s2543 = scalar_lea.smem [#allocation9], 2
          %2544 = sst [smem:[%s2543]] 2
          %s2545 = scalar_lea.smem [#allocation9], 3
          %2546 = sst [smem:[%s2545]] 32
          %s2547 = scalar_lea.smem [#allocation9], 4
          %2548 = sst [smem:[%s2547]] 32
          %s2549 = scalar_lea.smem [#allocation9], 5
          %2550 = sst [smem:[%s2549]] 2
          %2552 = dma.general %s2532, 256, %s2534, %s2505, [#allocation8], [#allocation9], %s2530, 0
        $region60: #{tpu_custom_call.1} parent=43 // pred_fallthru
          _
      $region44: #{tpu_custom_call.1} parent=5 // pred_fallthru
        _
      %p2553 = scmp.le.s32.totalorder 2, %s19
      // Predicated region
      $region61: #{tpu_custom_call.1} parent=5 // pred_check
        %p2554 = pneg %p2553
      $region62: #{tpu_custom_call.1} parent=5 // pred_check_branch
        %2556 = sbr.rel (%p2554) target = $region64
      $region63: #{tpu_custom_call.1} parent=5 // pred_region
        %s2557 = ssub.s32 %s19, 2
        // Predicated region
        $region65: #{tpu_custom_call.1} parent=63 // pred_check
          %p2558 = pneg %p179
        $region66: #{tpu_custom_call.1} parent=63 // pred_check_branch
          %2560 = sbr.rel (%p2558) target = $region68
        $region67: #{tpu_custom_call.1} parent=63 // pred_region
          %s2561 = smul.u32 4, %s25
          %p2562 = scmp.lt.s32.totalorder %s2561, 7
          %s2563 = scalar_select %p2562, %s2561, 7
          %s2564 = smul.addr %s2563, 8
          %s2565 = scalar_lea.vmem %s6, %s2564
        $region68: #{tpu_custom_call.1} parent=63 // pred_fallthru
          _
        // Predicated region
        $region69: #{tpu_custom_call.1} parent=63 // pred_check
          %p2566 = pneg %p205
        $region70: #{tpu_custom_call.1} parent=63 // pred_check_branch
          %2568 = sbr.rel (%p2566) target = $region72
        $region71: #{tpu_custom_call.1} parent=63 // pred_region
          %s2569 = sand.u32 %s190, 1
          %s2570 = scalar_lea.sflag [#allocation4], %s2569
          %s2571 = sand.u32 %s190, 1
          %s2572 = smul.addr %s2571, 16
          %s2573 = scalar_lea.vmem [#allocation7], %s2572
          %2575 = dma.done %s2570, 256
        $region72: #{tpu_custom_call.1} parent=63 // pred_fallthru
          _
      $region64: #{tpu_custom_call.1} parent=5 // pred_fallthru
        _
    $region6: #{tpu_custom_call.1} parent=1 // loop_footer
      %s23 = sadd.s32 1, %s19
    $region7: #{tpu_custom_call.1} parent=1 // loop_footer_branch
      %18 = sbr.rel target = $region3
    $region8: #{tpu_custom_call.1} parent=1 // loop_exit
      _
    %2576 = vsyncpa [#allocation3], 1
    %s2577 = scalar_lea.sflag [#allocation3], 1
    %2578 = vsyncpa %s2577, 1
    %2579 = vsyncpa [#allocation6], 1
    %2580 = vsyncpa [#allocation4], 1
    %s2581 = scalar_lea.sflag [#allocation4], 1
    %2582 = vsyncpa %s2581, 1

</llo_original>
